<compile_context>
chip_gen: v6e
topology: v6e:2x2x1
jax: 0.10.0
libtpu: 0.0.40
codegen_flags: <defaults>
</compile_context>

<pallas_src>
import functools

import jax
import jax.numpy as jnp
from jax.experimental import pallas as pl
from jax.experimental.pallas import tpu as pltpu

_HI = jax.lax.Precision.HIGHEST


def st_gcn_kernel(x_ref, a_ref, ws_ref, wt_ref, pv_ref, out_ref, *,
                  c_out, v, kt):
    x = x_ref[0]                            # (C_in, T*V) lane-dense
    A = a_ref[0]                            # (T*V, T*V) block-diagonal over t
    tv = x.shape[1]

    # --- fused 1x1 convs: [s1*wg ; sr*wr] @ x (graph mix + residual) --------
    u = jnp.dot(ws_ref[...], x, preferred_element_type=jnp.float32,
                precision=_HI)              # (2*C_out, T*V)
    xg = u[:c_out] + pv_ref[:, 0:1]         # s1-scaled conv out, + s1*bg bias
    res = u[c_out:]                         # sr-scaled residual conv out

    # --- graph matmul against block-diagonal adjacency (one MXU pass) -------
    y = jnp.dot(xg, A, preferred_element_type=jnp.float32, precision=_HI)
    y = y + pv_ref[:, 1:2]                  # BN1 shift (h1)
    y = jnp.where(y > 0, y, pv_ref[:, 2:3] * y)     # PReLU (tcn[1])

    # --- causal temporal conv: ReplicationPad + Conv2d((Kt,1)) --------------
    # shifted_d[:, t*V+w] == y[:, max(t-d,0)*V + w]  (replication for t < d)
    lane = jax.lax.broadcasted_iota(jnp.int32, (c_out, tv), 1)
    shifted = [y]
    cur = y
    for d in range(1, kt):                  # static unroll (Kt-1 rolls, XLU)
        rolled = pltpu.roll(y, shift=d * v, axis=1)
        cur = jnp.where(lane >= d * v, rolled, cur)
        shifted.append(cur)
    s_stack = jnp.concatenate(shifted, axis=0)       # (Kt*C_out, T*V)
    z = jnp.dot(wt_ref[...], s_stack, preferred_element_type=jnp.float32,
                precision=_HI)              # (C_out, T*V), s2 folded in weights

    # --- + (BN2 shift + BN_res shift) + residual + output PReLU -------------
    z = z + res + pv_ref[:, 3:4]
    z = jnp.where(z > 0, z, pv_ref[:, 4:5] * z)      # use_mdn=False
    out_ref[0] = z.astype(out_ref.dtype)


def st_gcn_forward(x, A, p):
    N, C_in, T, V = x.shape
    C_out = p["wg"].shape[0]
    Kt = p["wt"].shape[0]
    TV = T * V

    # --- fold BN scales into weights, pack per-channel vectors --------------
    s1 = p["s1"].reshape(C_out); h1 = p["h1"].reshape(C_out)
    s2 = p["s2"].reshape(C_out); h2 = p["h2"].reshape(C_out)
    sr = p["sr"].reshape(C_out); hr = p["hr"].reshape(C_out)
    a1 = p["a1"].reshape(C_out); a2 = p["a2"].reshape(C_out)
    bg = p["bg"].reshape(C_out)

    w_stack = jnp.concatenate(
        [s1[:, None] * p["wg"], sr[:, None] * p["wr"]], axis=0)   # (2C, C_in)
    wt_f = s2[None, :, None] * p["wt"]                            # (Kt, C, C)
    # column block d multiplies the d-steps-back shifted input (d = Kt-1-k)
    wt_cat = jnp.concatenate([wt_f[Kt - 1 - d] for d in range(Kt)], axis=1)
    # packed per-channel params: [s1*bg (pre-A bias), h1, a1, h2+hr, a2]
    pvec = jnp.stack([s1 * bg, h1, a1, h2 + hr, a2], axis=1)      # (C, 5)

    # --- lane-dense input / block-diagonal adjacency -------------------------
    x_flat = x.reshape(N, C_in, TV)
    eyeT = jnp.eye(T, dtype=A.dtype)
    a_blk = (A[:, :, :, None, :]
             * eyeT[None, :, None, :, None]).reshape(N, TV, TV)   # (N,TV,TV)

    kernel = functools.partial(st_gcn_kernel, c_out=C_out, v=V, kt=Kt)
    out_flat = pl.pallas_call(
        kernel,
        out_shape=jax.ShapeDtypeStruct((N, C_out, TV), x.dtype),
        grid=(N,),
        in_specs=[
            pl.BlockSpec((1, C_in, TV), lambda n: (n, 0, 0)),      # x
            pl.BlockSpec((1, TV, TV), lambda n: (n, 0, 0)),        # block-diag A
            pl.BlockSpec((2 * C_out, C_in), lambda n: (0, 0)),     # stacked 1x1 weights
            pl.BlockSpec((C_out, Kt * C_out), lambda n: (0, 0)),   # stacked temporal weights
            pl.BlockSpec((C_out, 5), lambda n: (0, 0)),            # packed per-channel params
        ],
        out_specs=pl.BlockSpec((1, C_out, TV), lambda n: (n, 0, 0)),
        compiler_params=pltpu.CompilerParams(
            dimension_semantics=("parallel",)),     # batch shards across TCs on v7x
    )(x_flat, a_blk, w_stack, wt_cat, pvec)
    return out_flat.reshape(N, C_out, T, V), A


def st_gcn_reference(x, A, p):
    """Pure-JAX reference mirroring the PyTorch forward (eval mode)."""
    N, C_in, T, V = x.shape
    C_out = p["wg"].shape[0]
    Kt = p["wt"].shape[0]
    bc = lambda v_: v_[None]  # (C,1,1) -> (1,C,1,1)
    xg = jnp.einsum('oc,nctv->notv', p["wg"], x, precision=_HI) + bc(p["bg"])
    y = jnp.einsum('nctv,ntvw->nctw', xg, A, precision=_HI)
    y = bc(p["s1"]) * y + bc(p["h1"])
    y = jnp.where(y > 0, y, bc(p["a1"]) * y)
    yp = jnp.concatenate([jnp.repeat(y[:, :, 0:1, :], Kt - 1, axis=2), y],
                         axis=2)
    z = jnp.zeros((N, C_out, T, V), x.dtype)
    for k in range(Kt):
        z = z + jnp.einsum('oc,nctv->notv', p["wt"][k], yp[:, :, k:k + T, :],
                           precision=_HI)
    z = bc(p["s2"]) * z + bc(p["h2"])
    res = jnp.einsum('oc,nctv->notv', p["wr"], x, precision=_HI)
    res = bc(p["sr"]) * res + bc(p["hr"])
    z = z + res
    return jnp.where(z > 0, z, bc(p["a2"]) * z)


if __name__ == "__main__":
    # st_gcn(in_channels=4, out_channels=8, kernel_size=(3, 8)), stride=1
    # x: (N, C_in, T, V), A: (N, K, V, V) with K == T (einsum 'nctv,ntvw->nctw')
    N, C_in, C_out, T, V, Kt = 2, 4, 8, 8, 16, 3
    f32 = jnp.float32
    ks = jax.random.split(jax.random.PRNGKey(0), 24)

    x = jax.random.normal(ks[0], (N, C_in, T, V), f32)
    A = 0.3 * jax.random.normal(ks[1], (N, T, V, V), f32)

    def bn_fold(kg, kb, km, kv, c):
        gamma = 1.0 + 0.1 * jax.random.normal(kg, (c,), f32)
        beta = 0.1 * jax.random.normal(kb, (c,), f32)
        mean = 0.1 * jax.random.normal(km, (c,), f32)
        var = jax.random.uniform(kv, (c,), f32, minval=0.5, maxval=1.5)
        scale = gamma / jnp.sqrt(var + 1e-5)
        shift = beta - mean * scale
        return scale, shift

    wg = 0.3 * jax.random.normal(ks[2], (C_out, C_in), f32)
    bg = 0.1 * jax.random.normal(ks[3], (C_out,), f32)
    s1, h1 = bn_fold(ks[4], ks[5], ks[6], ks[7], C_out)
    wt = 0.3 * jax.random.normal(ks[8], (Kt, C_out, C_out), f32)
    bt = 0.1 * jax.random.normal(ks[9], (C_out,), f32)
    s2, h2 = bn_fold(ks[10], ks[11], ks[12], ks[13], C_out)
    h2 = h2 + s2 * bt                       # fold temporal-conv bias into BN2
    wr = 0.3 * jax.random.normal(ks[14], (C_out, C_in), f32)
    br = 0.1 * jax.random.normal(ks[15], (C_out,), f32)
    sr, hr = bn_fold(ks[16], ks[17], ks[18], ks[19], C_out)
    hr = hr + sr * br                       # fold residual-conv bias into BNr
    alpha1 = jnp.float32(0.25)              # PReLU default init
    alpha2 = jnp.float32(0.25)

    c11 = lambda v_: v_.reshape(C_out, 1, 1)
    params = dict(
        wg=wg, bg=c11(bg), s1=c11(s1), h1=c11(h1),
        a1=jnp.full((C_out, 1, 1), alpha1, f32),
        wt=wt, s2=c11(s2), h2=c11(h2),
        wr=wr, sr=c11(sr), hr=c11(hr),
        a2=jnp.full((C_out, 1, 1), alpha2, f32),
    )

    out, A_out = st_gcn_forward(x, A, params)
    out = jax.block_until_ready(out)

    ref = st_gcn_reference(x, A, params)
    assert out.shape == (N, C_out, T, V)
    assert jnp.allclose(out, ref, rtol=1e-3, atol=1e-3), (
        float(jnp.max(jnp.abs(out - ref))))
    print("KERNEL_OK")
</pallas_src>

<mosaic_0001>
module attributes {stable_mosaic.version = 11 : i64} {
  func.func @st_gcn_kernel(%arg0: i32, %arg1: memref<1x4x128xf32, #tpu.memory_space<vmem>>, %arg2: memref<1x128x128xf32, #tpu.memory_space<vmem>>, %arg3: memref<16x4xf32, #tpu.memory_space<vmem>>, %arg4: memref<8x24xf32, #tpu.memory_space<vmem>>, %arg5: memref<8x5xf32, #tpu.memory_space<vmem>>, %arg6: memref<1x8x128xf32, #tpu.memory_space<vmem>>) attributes {dimension_semantics = [#tpu.dimension_semantics<parallel>], iteration_bounds = array<i64: 2>, scalar_prefetch = 0 : i64, scratch_operands = 0 : i64, tpu.core_type = #tpu.core_type<tc>, window_params = [{transform_indices = @transform_0, window_bounds = array<i64: 1, 4, 128>}, {transform_indices = @transform_1, window_bounds = array<i64: 1, 128, 128>}, {pipeline_mode = #tpu.pipeline_mode<synchronous>, transform_indices = @transform_2, window_bounds = array<i64: 16, 4>}, {pipeline_mode = #tpu.pipeline_mode<synchronous>, transform_indices = @transform_3, window_bounds = array<i64: 8, 24>}, {pipeline_mode = #tpu.pipeline_mode<synchronous>, transform_indices = @transform_4, window_bounds = array<i64: 8, 5>}, {transform_indices = @transform_5, window_bounds = array<i64: 1, 8, 128>}]} {
    %c0 = arith.constant 0 : index
    %c0_0 = arith.constant 0 : index
    %c0_1 = arith.constant 0 : index
    %0 = vector.load %arg1[%c0, %c0_0, %c0_1] : memref<1x4x128xf32, #tpu.memory_space<vmem>>, vector<1x4x128xf32>
    %1 = vector.shape_cast %0 : vector<1x4x128xf32> to vector<4x128xf32>
    %c0_2 = arith.constant 0 : index
    %c0_3 = arith.constant 0 : index
    %c0_4 = arith.constant 0 : index
    %2 = vector.load %arg2[%c0_2, %c0_3, %c0_4] : memref<1x128x128xf32, #tpu.memory_space<vmem>>, vector<1x128x128xf32>
    %3 = vector.shape_cast %2 : vector<1x128x128xf32> to vector<128x128xf32>
    %c0_5 = arith.constant 0 : index
    %c0_6 = arith.constant 0 : index
    %4 = vector.load %arg3[%c0_5, %c0_6] : memref<16x4xf32, #tpu.memory_space<vmem>>, vector<16x4xf32>
    %cst = arith.constant dense<0.000000e+00> : vector<16x128xf32>
    %5 = tpu.matmul %4, %1, %cst {dimension_numbers = #tpu.dot_dimension_numbers<[1], [0], [0], [1], [0, 0, 1, 1], [], []>, precision = #tpu.contract_precision<fp32>} : vector<16x4xf32>, vector<4x128xf32>, vector<16x128xf32> -> vector<16x128xf32>
    %6 = vector.extract_strided_slice %5 {offsets = [0, 0], sizes = [8, 128], strides = [1, 1]} : vector<16x128xf32> to vector<8x128xf32>
    %c0_7 = arith.constant 0 : index
    %c0_8 = arith.constant 0 : index
    %7 = vector.load %arg5[%c0_7, %c0_8] : memref<8x5xf32, #tpu.memory_space<vmem>>, vector<8x1xf32>
    %8 = vector.broadcast %7 : vector<8x1xf32> to vector<8x128xf32>
    %9 = arith.addf %6, %8 : vector<8x128xf32>
    %10 = vector.extract_strided_slice %5 {offsets = [8, 0], sizes = [8, 128], strides = [1, 1]} : vector<16x128xf32> to vector<8x128xf32>
    %cst_9 = arith.constant dense<0.000000e+00> : vector<8x128xf32>
    %11 = tpu.matmul %9, %3, %cst_9 {dimension_numbers = #tpu.dot_dimension_numbers<[1], [0], [0], [1], [0, 0, 1, 1], [], []>, precision = #tpu.contract_precision<fp32>} : vector<8x128xf32>, vector<128x128xf32>, vector<8x128xf32> -> vector<8x128xf32>
    %c0_10 = arith.constant 0 : index
    %c1 = arith.constant 1 : index
    %12 = vector.load %arg5[%c0_10, %c1] : memref<8x5xf32, #tpu.memory_space<vmem>>, vector<8x1xf32>
    %13 = vector.broadcast %12 : vector<8x1xf32> to vector<8x128xf32>
    %14 = arith.addf %11, %13 : vector<8x128xf32>
    %cst_11 = arith.constant 0.000000e+00 : f32
    %15 = vector.broadcast %cst_11 : f32 to vector<8x128xf32>
    %16 = arith.cmpf ogt, %14, %15 : vector<8x128xf32>
    %c0_12 = arith.constant 0 : index
    %c2 = arith.constant 2 : index
    %17 = vector.load %arg5[%c0_12, %c2] : memref<8x5xf32, #tpu.memory_space<vmem>>, vector<8x1xf32>
    %18 = vector.broadcast %17 : vector<8x1xf32> to vector<8x128xf32>
    %19 = arith.mulf %18, %14 : vector<8x128xf32>
    %20 = arith.select %16, %14, %19 : vector<8x128xi1>, vector<8x128xf32>
    %21 = tpu.iota {dimensions = array<i32: 1>} : vector<8x128xi32>
    %c16_i32 = arith.constant 16 : i32
    %22 = tpu.dynamic_rotate %20 by %c16_i32 dim 1 : vector<8x128xf32>, i32 -> vector<8x128xf32>
    %c16_i32_13 = arith.constant 16 : i32
    %23 = vector.broadcast %c16_i32_13 : i32 to vector<8x128xi32>
    %24 = arith.cmpi sge, %21, %23 : vector<8x128xi32>
    %25 = arith.select %24, %22, %20 : vector<8x128xi1>, vector<8x128xf32>
    %c32_i32 = arith.constant 32 : i32
    %26 = tpu.dynamic_rotate %20 by %c32_i32 dim 1 : vector<8x128xf32>, i32 -> vector<8x128xf32>
    %c32_i32_14 = arith.constant 32 : i32
    %27 = vector.broadcast %c32_i32_14 : i32 to vector<8x128xi32>
    %28 = arith.cmpi sge, %21, %27 : vector<8x128xi32>
    %29 = arith.select %28, %26, %25 : vector<8x128xi1>, vector<8x128xf32>
    %30 = tpu.concatenate %20, %25, %29 in 0 : vector<8x128xf32>, vector<8x128xf32>, vector<8x128xf32> -> vector<24x128xf32>
    %c0_15 = arith.constant 0 : index
    %c0_16 = arith.constant 0 : index
    %31 = vector.load %arg4[%c0_15, %c0_16] : memref<8x24xf32, #tpu.memory_space<vmem>>, vector<8x24xf32>
    %cst_17 = arith.constant dense<0.000000e+00> : vector<8x128xf32>
    %32 = tpu.matmul %31, %30, %cst_17 {dimension_numbers = #tpu.dot_dimension_numbers<[1], [0], [0], [1], [0, 0, 1, 1], [], []>, precision = #tpu.contract_precision<fp32>} : vector<8x24xf32>, vector<24x128xf32>, vector<8x128xf32> -> vector<8x128xf32>
    %33 = arith.addf %32, %10 : vector<8x128xf32>
    %c0_18 = arith.constant 0 : index
    %c3 = arith.constant 3 : index
    %34 = vector.load %arg5[%c0_18, %c3] : memref<8x5xf32, #tpu.memory_space<vmem>>, vector<8x1xf32>
    %35 = vector.broadcast %34 : vector<8x1xf32> to vector<8x128xf32>
    %36 = arith.addf %33, %35 : vector<8x128xf32>
    %cst_19 = arith.constant 0.000000e+00 : f32
    %37 = vector.broadcast %cst_19 : f32 to vector<8x128xf32>
    %38 = arith.cmpf ogt, %36, %37 : vector<8x128xf32>
    %c0_20 = arith.constant 0 : index
    %c4 = arith.constant 4 : index
    %39 = vector.load %arg5[%c0_20, %c4] : memref<8x5xf32, #tpu.memory_space<vmem>>, vector<8x1xf32>
    %40 = vector.broadcast %39 : vector<8x1xf32> to vector<8x128xf32>
    %41 = arith.mulf %40, %36 : vector<8x128xf32>
    %42 = arith.select %38, %36, %41 : vector<8x128xi1>, vector<8x128xf32>
    %c0_21 = arith.constant 0 : index
    %c0_22 = arith.constant 0 : index
    %c0_23 = arith.constant 0 : index
    %43 = vector.load %arg6[%c0_21, %c0_22, %c0_23] : memref<1x8x128xf32, #tpu.memory_space<vmem>>, vector<1x8x128xf32>
    %44 = vector.shape_cast %43 : vector<1x8x128xf32> to vector<8x128xf32>
    %45 = vector.shape_cast %42 : vector<8x128xf32> to vector<1x8x128xf32>
    tpu.vector_store %arg6[%c0_21, %c0_22, %c0_23], %45 {strides = array<i32>} : memref<1x8x128xf32, #tpu.memory_space<vmem>>, vector<1x8x128xf32>,
    return
  }
  func.func @transform_0(%arg0: i32) -> (i32, i32, i32) {
    %c0_i32 = arith.constant 0 : i32
    %c0_i32_0 = arith.constant 0 : i32
    %c0_i32_1 = arith.constant 0 : i32
    return %arg0, %c0_i32, %c0_i32_0 : i32, i32, i32
  }
  func.func @transform_1(%arg0: i32) -> (i32, i32, i32) {
    %c0_i32 = arith.constant 0 : i32
    %c0_i32_0 = arith.constant 0 : i32
    %c0_i32_1 = arith.constant 0 : i32
    return %arg0, %c0_i32, %c0_i32_0 : i32, i32, i32
  }
  func.func @transform_2(%arg0: i32) -> (i32, i32) {
    %c0_i32 = arith.constant 0 : i32
    %c0_i32_0 = arith.constant 0 : i32
    %c0_i32_1 = arith.constant 0 : i32
    return %c0_i32, %c0_i32_0 : i32, i32
  }
  func.func @transform_3(%arg0: i32) -> (i32, i32) {
    %c0_i32 = arith.constant 0 : i32
    %c0_i32_0 = arith.constant 0 : i32
    %c0_i32_1 = arith.constant 0 : i32
    return %c0_i32, %c0_i32_0 : i32, i32
  }
  func.func @transform_4(%arg0: i32) -> (i32, i32) {
    %c0_i32 = arith.constant 0 : i32
    %c0_i32_0 = arith.constant 0 : i32
    %c0_i32_1 = arith.constant 0 : i32
    return %c0_i32, %c0_i32_0 : i32, i32
  }
  func.func @transform_5(%arg0: i32) -> (i32, i32, i32) {
    %c0_i32 = arith.constant 0 : i32
    %c0_i32_0 = arith.constant 0 : i32
    %c0_i32_1 = arith.constant 0 : i32
    return %arg0, %c0_i32, %c0_i32_0 : i32, i32, i32
  }
}

</mosaic_0001>

<llo_original>
// kernel: tpu_custom_call.1
$region0: #{tpu_custom_call.1}
  #allocation0 [shape = 'u32[]', space=smem, size = 0x4, offset = 0x4, fixed_abs, tag = 'smem constant byte address 0x4 - core index']
  #allocation1 [shape = 'u32[144,128]{1,0:T(1,128)}', space=vmem, size = 0x12000, scoped, tag = 'internal scratch']
  %s0 = inlined_call_operand.vmem [shape: f32[2,4,128], index: 0, kind: input, shape index: {}]
  %s1 = inlined_call_operand.hbm [shape: f32[2,128,128], index: 1, kind: input, shape index: {}]
  %s2 = inlined_call_operand.vmem [shape: f32[16,4], index: 2, kind: input, shape index: {}]
  %s3 = inlined_call_operand.vmem [shape: f32[8,24], index: 3, kind: input, shape index: {}]
  %s4 = inlined_call_operand.vmem [shape: f32[8,5], index: 4, kind: input, shape index: {}]
  %s5 = inlined_call_operand.hbm [shape: f32[2,8,128], index: 5, kind: output, shape index: {}]
  %s6 = sld [smem:[#allocation0]]
  $region57: #{tpu_custom_call.1} parent=0
    _
  %s8 = ssub.s32 1, %s6
  %s9 = scalar_select 0, %s8, %s6
  $region1: #{tpu_custom_call.1} parent=0
    #allocation2 [shape = 'u8[131072]{0}', space=vmem, size = 0x20000, scoped, tag = 'input window, operand 1']
    #allocation3 [shape = 's32[2]{0}', space=sflag, size = 0x8, scoped, tag = 'scoped memory for tpu_custom_call.1']
    #allocation4 [shape = 's32[2]{0}', space=sflag, size = 0x8, scoped, tag = 'scoped memory for tpu_custom_call.1']
    #allocation5 [shape = 'u8[8192]{0}', space=vmem, size = 0x2000, scoped, tag = 'output window, operand 0']
    %10 = vsyncpa [#allocation3], 0
    %s11 = scalar_lea.sflag [#allocation3], 1
    %12 = vsyncpa %s11, 0
    %13 = vsyncpa [#allocation4], 0
    %s14 = scalar_lea.sflag [#allocation4], 1
    %15 = vsyncpa %s14, 0
    loop: start=0, step=1, limit=4
    $region2: #{tpu_custom_call.1} parent=1 // loop_pre_header
      _
    $region3: #{tpu_custom_call.1} parent=1 // loop_header
      %s17 = sphi 0, %s21
      %p18 = scmp.ge.s32.totalorder %s17, 4
      %s27 = sphi 0, %s29
      %s30 = sphi 0, %s27
      %s31 = sphi 0, %s30
      %s47 = sphi 0, %s31
      %s53 = sphi 0, %s55
      %s56 = sphi 0, %s53
      %s57 = sphi 0, %s56
      %s73 = sphi 0, %s57
      %s77 = sphi 0, %s77
      %s79 = sphi 0, %s77
      %s80 = sphi 0, %s79
      %s94 = sphi 0, %s80
      %s98 = sphi 0, %s98
      %s100 = sphi 0, %s98
      %s101 = sphi 0, %s100
      %s115 = sphi 0, %s101
      %s119 = sphi 0, %s119
      %s121 = sphi 0, %s119
      %s122 = sphi 0, %s121
      %s136 = sphi 0, %s122
      %s142 = sphi 0, %s144
      %s145 = sphi 0, %s142
      %s146 = sphi 0, %s145
      %s162 = sphi 0, %s146
    $region4: #{tpu_custom_call.1} parent=1 // loop_header_branch
      %20 = sbr.rel (%p18) target = $region8
    $region5: #{tpu_custom_call.1} parent=1 // loop_body
      %s22 = ssub.s32 %s17, 1
      %s23 = ssub.s32 %s17, 2
      %s24 = sadd.s32 %s17, 1
      %s25 = ssub.s32 %s17, %s24
      %p26 = scmp.eq.s32.totalorder %s25, 0
      %s28 = sadd.s32 %s27, 1
      %s29 = scalar_select %p26, %s27, %s28
      %p32 = pneg %p26
      %p33 = scmp.eq.s32.totalorder %s17, 1
      %p34 = por %p32, %p33
      %p35 = scmp.ne.s32.totalorder %s27, %s30
      %p36 = scmp.eq.s32.totalorder %s17, 0
      %p37 = por %p35, %p36
      %p38 = scmp.ne.s32.totalorder %s27, %s30
      %p39 = scmp.eq.s32.totalorder %s22, 1
      %p40 = por %p38, %p39
      %p41 = scmp.ne.s32.totalorder %s30, %s31
      %p42 = scmp.eq.s32.totalorder %s22, 0
      %p43 = por %p41, %p42
      %p44 = scmp.ne.s32.totalorder %s30, %s31
      %p45 = scmp.eq.s32.totalorder %s23, 1
      %p46 = por %p44, %p45
      %p48 = scmp.ne.s32.totalorder %s31, %s47
      %p49 = scmp.eq.s32.totalorder %s23, 0
      %p50 = por %p48, %p49
      %s51 = ssub.s32 %s17, %s24
      %p52 = scmp.eq.s32.totalorder %s51, 0
      %s54 = sadd.s32 %s53, 1
      %s55 = scalar_select %p52, %s53, %s54
      %p58 = pneg %p52
      %p59 = scmp.eq.s32.totalorder %s17, 1
      %p60 = por %p58, %p59
      %p61 = scmp.ne.s32.totalorder %s53, %s56
      %p62 = scmp.eq.s32.totalorder %s17, 0
      %p63 = por %p61, %p62
      %p64 = scmp.ne.s32.totalorder %s53, %s56
      %p65 = scmp.eq.s32.totalorder %s22, 1
      %p66 = por %p64, %p65
      %p67 = scmp.ne.s32.totalorder %s56, %s57
      %p68 = scmp.eq.s32.totalorder %s22, 0
      %p69 = por %p67, %p68
      %p70 = scmp.ne.s32.totalorder %s56, %s57
      %p71 = scmp.eq.s32.totalorder %s23, 1
      %p72 = por %p70, %p71
      %p74 = scmp.ne.s32.totalorder %s57, %s73
      %p75 = scmp.eq.s32.totalorder %s23, 0
      %p76 = por %p74, %p75
      %s78 = sadd.s32 %s77, 1
      %p81 = scmp.eq.s32.totalorder %s17, 1
      %p82 = scmp.ne.s32.totalorder %s77, %s79
      %p83 = scmp.eq.s32.totalorder %s17, 0
      %p84 = por %p82, %p83
      %p85 = scmp.ne.s32.totalorder %s77, %s79
      %p86 = scmp.eq.s32.totalorder %s22, 1
      %p87 = por %p85, %p86
      %p88 = scmp.ne.s32.totalorder %s79, %s80
      %p89 = scmp.eq.s32.totalorder %s22, 0
      %p90 = por %p88, %p89
      %p91 = scmp.ne.s32.totalorder %s79, %s80
      %p92 = scmp.eq.s32.totalorder %s23, 1
      %p93 = por %p91, %p92
      %p95 = scmp.ne.s32.totalorder %s80, %s94
      %p96 = scmp.eq.s32.totalorder %s23, 0
      %p97 = por %p95, %p96
      %s99 = sadd.s32 %s98, 1
      %p102 = scmp.eq.s32.totalorder %s17, 1
      %p103 = scmp.ne.s32.totalorder %s98, %s100
      %p104 = scmp.eq.s32.totalorder %s17, 0
      %p105 = por %p103, %p104
      %p106 = scmp.ne.s32.totalorder %s98, %s100
      %p107 = scmp.eq.s32.totalorder %s22, 1
      %p108 = por %p106, %p107
      %p109 = scmp.ne.s32.totalorder %s100, %s101
      %p110 = scmp.eq.s32.totalorder %s22, 0
      %p111 = por %p109, %p110
      %p112 = scmp.ne.s32.totalorder %s100, %s101
      %p113 = scmp.eq.s32.totalorder %s23, 1
      %p114 = por %p112, %p113
      %p116 = scmp.ne.s32.totalorder %s101, %s115
      %p117 = scmp.eq.s32.totalorder %s23, 0
      %p118 = por %p116, %p117
      %s120 = sadd.s32 %s119, 1
      %p123 = scmp.eq.s32.totalorder %s17, 1
      %p124 = scmp.ne.s32.totalorder %s119, %s121
      %p125 = scmp.eq.s32.totalorder %s17, 0
      %p126 = por %p124, %p125
      %p127 = scmp.ne.s32.totalorder %s119, %s121
      %p128 = scmp.eq.s32.totalorder %s22, 1
      %p129 = por %p127, %p128
      %p130 = scmp.ne.s32.totalorder %s121, %s122
      %p131 = scmp.eq.s32.totalorder %s22, 0
      %p132 = por %p130, %p131
      %p133 = scmp.ne.s32.totalorder %s121, %s122
      %p134 = scmp.eq.s32.totalorder %s23, 1
      %p135 = por %p133, %p134
      %p137 = scmp.ne.s32.totalorder %s122, %s136
      %p138 = scmp.eq.s32.totalorder %s23, 0
      %p139 = por %p137, %p138
      %s140 = ssub.s32 %s17, %s24
      %p141 = scmp.eq.s32.totalorder %s140, 0
      %s143 = sadd.s32 %s142, 1
      %s144 = scalar_select %p141, %s142, %s143
      %p147 = pneg %p141
      %p148 = scmp.eq.s32.totalorder %s17, 1
      %p149 = por %p147, %p148
      %p150 = scmp.ne.s32.totalorder %s142, %s145
      %p151 = scmp.eq.s32.totalorder %s17, 0
      %p152 = por %p150, %p151
      %p153 = scmp.ne.s32.totalorder %s142, %s145
      %p154 = scmp.eq.s32.totalorder %s22, 1
      %p155 = por %p153, %p154
      %p156 = scmp.ne.s32.totalorder %s145, %s146
      %p157 = scmp.eq.s32.totalorder %s22, 0
      %p158 = por %p156, %p157
      %p159 = scmp.ne.s32.totalorder %s145, %s146
      %p160 = scmp.eq.s32.totalorder %s23, 1
      %p161 = por %p159, %p160
      %p163 = scmp.ne.s32.totalorder %s146, %s162
      %p164 = scmp.eq.s32.totalorder %s23, 0
      %p165 = por %p163, %p164
      %p166 = scmp.le.s32.totalorder 1, %s17
      %p167 = scmp.lt.s32.totalorder %s17, 3
      %p168 = pnand %p166, %p167
      %p169 = pneg %p168
      // Predicated region
      $region9: #{tpu_custom_call.1} parent=5 // pred_check
        _
      $region10: #{tpu_custom_call.1} parent=5 // pred_check_branch
        %171 = sbr.rel (%p168) target = $region12
      $region11: #{tpu_custom_call.1} parent=5 // pred_region
        %s172 = ssub.s32 %s17, 1
        // Predicated region
        $region13: #{tpu_custom_call.1} parent=11 // pred_check
          %p173 = pneg %p90
        $region14: #{tpu_custom_call.1} parent=11 // pred_check_branch
          %175 = sbr.rel (%p173) target = $region16
        $region15: #{tpu_custom_call.1} parent=11 // pred_region
          _
        $region16: #{tpu_custom_call.1} parent=11 // pred_fallthru
          _
        // Predicated region
        $region17: #{tpu_custom_call.1} parent=11 // pred_check
          %p176 = pneg %p111
        $region18: #{tpu_custom_call.1} parent=11 // pred_check_branch
          %178 = sbr.rel (%p176) target = $region20
        $region19: #{tpu_custom_call.1} parent=11 // pred_region
          _
        $region20: #{tpu_custom_call.1} parent=11 // pred_fallthru
          _
        // Predicated region
        $region21: #{tpu_custom_call.1} parent=11 // pred_check
          %p179 = pneg %p132
        $region22: #{tpu_custom_call.1} parent=11 // pred_check_branch
          %181 = sbr.rel (%p179) target = $region24
        $region23: #{tpu_custom_call.1} parent=11 // pred_region
          _
        $region24: #{tpu_custom_call.1} parent=11 // pred_fallthru
          _
      $region12: #{tpu_custom_call.1} parent=5 // pred_fallthru
        _
      %p182 = scmp.lt.s32.totalorder %s17, 2
      // Predicated region
      $region25: #{tpu_custom_call.1} parent=5 // pred_check
        %p183 = pneg %p182
      $region26: #{tpu_custom_call.1} parent=5 // pred_check_branch
        %185 = sbr.rel (%p183) target = $region28
      $region27: #{tpu_custom_call.1} parent=5 // pred_region
        // Predicated region
        $region29: #{tpu_custom_call.1} parent=27 // pred_check
          %p186 = pneg %p37
        $region30: #{tpu_custom_call.1} parent=27 // pred_check_branch
          %188 = sbr.rel (%p186) target = $region32
        $region31: #{tpu_custom_call.1} parent=27 // pred_region
          %p189 = scmp.lt.s32.totalorder %s17, 1
          %s190 = scalar_select %p189, %s17, 1
          %s191 = smul.addr %s190, 4
          %s192 = scalar_lea.vmem %s0, %s191
        $region32: #{tpu_custom_call.1} parent=27 // pred_fallthru
          _
        // Predicated region
        $region33: #{tpu_custom_call.1} parent=27 // pred_check
          %p193 = pneg %p63
        $region34: #{tpu_custom_call.1} parent=27 // pred_check_branch
          %195 = sbr.rel (%p193) target = $region36
        $region35: #{tpu_custom_call.1} parent=27 // pred_region
          %s196 = sand.u32 %s53, 1
          %s197 = scalar_lea.sflag [#allocation3], %s196
          %s198 = sand.u32 %s53, 1
          %s199 = smul.addr %s198, 128
          %s200 = scalar_lea.vmem [#allocation2], %s199
          %s202 = ssub.s32 2048, 2048
          %203 = vsyncadd %s197, %s202
          %s204 = smul.addr %s17, 16
          %s205 = smul.addr %s204, 128
          %s206 = scalar_lea.hbm %s1, %s205
          %s207 = sshll.u32 %s200, 4
          %s208 = int_to_ptr.vmem [resolvable:$true] %s207
          %213 = dma.hbm_to_vmem [thread:$0]  %s206, 2048, %s208, %s197, 128, 128, 8
        $region36: #{tpu_custom_call.1} parent=27 // pred_fallthru
          _
      $region28: #{tpu_custom_call.1} parent=5 // pred_fallthru
        _
      %p214 = scmp.le.s32.totalorder 1, %s17
      %p215 = scmp.lt.s32.totalorder %s17, 3
      %p216 = pnand %p214, %p215
      %p217 = pneg %p216
      // Predicated region
      $region37: #{tpu_custom_call.1} parent=5 // pred_check
        _
      $region38: #{tpu_custom_call.1} parent=5 // pred_check_branch
        %219 = sbr.rel (%p216) target = $region40
      $region39: #{tpu_custom_call.1} parent=5 // pred_region
        %s220 = ssub.s32 %s17, 1
        %s221 = sand.u32 %s56, 1
        %s222 = scalar_lea.sflag [#allocation3], %s221
        %s223 = sand.u32 %s56, 1
        %s224 = smul.addr %s223, 128
        %s225 = scalar_lea.vmem [#allocation2], %s224
        // Predicated region
        $region41: #{tpu_custom_call.1} parent=39 // pred_check
          %p226 = pneg %p69
        $region42: #{tpu_custom_call.1} parent=39 // pred_check_branch
          %228 = sbr.rel (%p226) target = $region44
        $region43: #{tpu_custom_call.1} parent=39 // pred_region
          %229 = dma.done %s222, 2048
        $region44: #{tpu_custom_call.1} parent=39 // pred_fallthru
          _
        %p230 = scmp.lt.s32.totalorder %s22, 1
        %s231 = scalar_select %p230, %s22, 1
        %s232 = smul.addr %s231, 4
        %s233 = scalar_lea.vmem %s0, %s232
        %p234 = pneg %p43
        %p235 = pneg %p40
        %s236 = sand.u32 %s56, 1
        %s237 = scalar_lea.sflag [#allocation3], %s236
        %s238 = sand.u32 %s56, 1
        %s239 = smul.addr %s238, 128
        %s240 = scalar_lea.vmem [#allocation2], %s239
        %p241 = pneg %p69
        %p242 = pneg %p66
        %p243 = pneg %p90
        %p244 = pneg %p87
        %p245 = pneg %p111
        %p246 = pneg %p108
        %p247 = pneg %p132
        %p248 = pneg %p129
        %p249 = pneg %p158
        %p250 = pneg %p155
        %s251 = sand.u32 %s145, 1
        %s252 = scalar_lea.sflag [#allocation4], %s251
        %s253 = sand.u32 %s145, 1
        %s254 = smul.addr %s253, 8
        %s255 = scalar_lea.vmem [#allocation5], %s254
        %p256 = scmp.lt.s32.totalorder %s22, 1
        %s257 = scalar_select %p256, %s22, 1
        %s258 = smul.addr %s257, 4
        %s259 = scalar_lea.vmem %s0, %s258
        %v260 = vld [vmem:[%s259] sm:$0xf]
        %v261 = vld [vmem:[%s225] sm:$0xff]
        %v262 = vld [vmem:[%s225 + $0x8] sm:$0xff]
        %v263 = vld [vmem:[%s225 + $0x10] sm:$0xff]
        %v264 = vld [vmem:[%s225 + $0x18] sm:$0xff]
        %v265 = vld [vmem:[%s225 + $0x20] sm:$0xff]
        %v266 = vld [vmem:[%s225 + $0x28] sm:$0xff]
        %v267 = vld [vmem:[%s225 + $0x30] sm:$0xff]
        %v268 = vld [vmem:[%s225 + $0x38] sm:$0xff]
        %v269 = vld [vmem:[%s225 + $0x40] sm:$0xff]
        %v270 = vld [vmem:[%s225 + $0x48] sm:$0xff]
        %v271 = vld [vmem:[%s225 + $0x50] sm:$0xff]
        %v272 = vld [vmem:[%s225 + $0x58] sm:$0xff]
        %v273 = vld [vmem:[%s225 + $0x60] sm:$0xff]
        %v274 = vld [vmem:[%s225 + $0x68] sm:$0xff]
        %v275 = vld [vmem:[%s225 + $0x70] sm:$0xff]
        %v276 = vld [vmem:[%s225 + $0x78] sm:$0xff]
        %v277 = vld [vmem:[%s2] sm:$0xff]
        %v278 = vld [vmem:[%s2 + $0x8] sm:$0xff]
        %vm279 = vcmask 31744
        %v281 = vsel %vm279, %v277, 0
        %v284 = vsel %vm279, %v278, 0
        %vm286 = vcmask 1043456
        %v288 = vsel %vm286, %v260, 0
        %290 = vmatprep.subr.mxu0 0.0
        %291 = vmatpush1.msra.mxu0 0.0
        %292 = vmatprep.subr.mxu0 0.0
        %293 = vmatpush1.msra.mxu0 0.0
        %294 = vmatprep.subr.mxu0 0.0
        %295 = vmatpush1.msra.mxu0 0.0
        %296 = vmatprep.subr.mxu0 0.0
        %297 = vmatpush1.msra.mxu0 0.0
        %298 = vmatprep.subr.mxu0 0.0
        %299 = vmatpush1.msra.mxu0 0.0
        %300 = vmatprep.subr.mxu0 0.0
        %301 = vmatpush1.msra.mxu0 0.0
        %302 = vmatprep.subr.mxu0 0.0
        %303 = vmatpush1.msra.mxu0 0.0
        %304 = vmatprep.subr.mxu0 0.0
        %305 = vmatpush1.msra.mxu0 0.0
        %306 = vmatprep.subr.mxu0 0.0
        %307 = vmatpush1.msra.mxu0 0.0
        %308 = vmatprep.subr.mxu0 0.0
        %309 = vmatpush1.msra.mxu0 0.0
        %310 = vmatprep.subr.mxu0 0.0
        %311 = vmatpush1.msra.mxu0 0.0
        %312 = vmatprep.subr.mxu0 0.0
        %313 = vmatpush1.msra.mxu0 0.0
        %314 = vmatprep.subr.mxu0 0.0
        %315 = vmatpush1.msra.mxu0 0.0
        %316 = vmatprep.subr.mxu0 0.0
        %317 = vmatpush1.msra.mxu0 0.0
        %318 = vmatprep.subr.mxu0 0.0
        %319 = vmatpush1.msra.mxu0 0.0
        %320 = vmatprep.subr.mxu0 0.0
        %v321 = vand.u32 %v288, 4294901760
        %322 = vmatpush1.msra.mxu0 %v321
        %323 = vmatprep.subr.mxu0 0.0
        %324 = vmatpush2.msra.mxu0 0.0
        %325 = vmatprep.subr.mxu0 0.0
        %326 = vmatpush2.msra.mxu0 0.0
        %327 = vmatprep.subr.mxu0 0.0
        %328 = vmatpush2.msra.mxu0 0.0
        %329 = vmatprep.subr.mxu0 0.0
        %330 = vmatpush2.msra.mxu0 0.0
        %331 = vmatprep.subr.mxu0 0.0
        %332 = vmatpush2.msra.mxu0 0.0
        %333 = vmatprep.subr.mxu0 0.0
        %334 = vmatpush2.msra.mxu0 0.0
        %335 = vmatprep.subr.mxu0 0.0
        %336 = vmatpush2.msra.mxu0 0.0
        %337 = vmatprep.subr.mxu0 0.0
        %338 = vmatpush2.msra.mxu0 0.0
        %339 = vmatprep.subr.mxu0 0.0
        %340 = vmatpush2.msra.mxu0 0.0
        %341 = vmatprep.subr.mxu0 0.0
        %342 = vmatpush2.msra.mxu0 0.0
        %343 = vmatprep.subr.mxu0 0.0
        %344 = vmatpush2.msra.mxu0 0.0
        %345 = vmatprep.subr.mxu0 0.0
        %346 = vmatpush2.msra.mxu0 0.0
        %347 = vmatprep.subr.mxu0 0.0
        %348 = vmatpush2.msra.mxu0 0.0
        %349 = vmatprep.subr.mxu0 0.0
        %350 = vmatpush2.msra.mxu0 0.0
        %351 = vmatprep.subr.mxu0 0.0
        %352 = vmatpush2.msra.mxu0 0.0
        %353 = vmatprep.subr.mxu0 0.0
        %354 = vmatpush2.msra.mxu0 0.0
        %355 = vmatprep.mubr.f32.mxu0 0.0
        %v356 = vand.u32 %v281, 4294901760
        %v357 = vsub.f32 %v281, %v356
        %v358 = vand.u32 %v357, 4294901760
        %v359 = vsub.f32 %v357, %v358
        %v360 = vand.u32 %v359, 4294901760
        %361 = vmatmul.mubr.f32.gmra.mxu0 %v360
        %v362 = vpop.f32.mrf.mxu0
        %v363 = vadd.f32 0.0, %v362
        %v364 = vpop.f32.mrf.mxu0
        %365 = vmatprep.mubr.f32.mxu0 0.0
        %v366 = vand.u32 %v284, 4294901760
        %v367 = vsub.f32 %v284, %v366
        %v368 = vand.u32 %v367, 4294901760
        %v369 = vsub.f32 %v367, %v368
        %v370 = vand.u32 %v369, 4294901760
        %371 = vmatmul.mubr.f32.gmra.mxu0 %v370
        %v372 = vpop.f32.mrf.mxu0
        %v373 = vadd.f32 0.0, %v372
        %v374 = vpop.f32.mrf.mxu0
        %375 = vdwg.mxu0
        %376 = vmatprep.subr.mxu0 0.0
        %377 = vmatpush1.msra.mxu0 0.0
        %378 = vmatprep.subr.mxu0 0.0
        %379 = vmatpush1.msra.mxu0 0.0
        %380 = vmatprep.subr.mxu0 0.0
        %381 = vmatpush1.msra.mxu0 0.0
        %382 = vmatprep.subr.mxu0 0.0
        %383 = vmatpush1.msra.mxu0 0.0
        %384 = vmatprep.subr.mxu0 0.0
        %385 = vmatpush1.msra.mxu0 0.0
        %386 = vmatprep.subr.mxu0 0.0
        %387 = vmatpush1.msra.mxu0 0.0
        %388 = vmatprep.subr.mxu0 0.0
        %389 = vmatpush1.msra.mxu0 0.0
        %390 = vmatprep.subr.mxu0 0.0
        %391 = vmatpush1.msra.mxu0 0.0
        %392 = vmatprep.subr.mxu0 0.0
        %393 = vmatpush1.msra.mxu0 0.0
        %394 = vmatprep.subr.mxu0 0.0
        %395 = vmatpush1.msra.mxu0 0.0
        %396 = vmatprep.subr.mxu0 0.0
        %397 = vmatpush1.msra.mxu0 0.0
        %398 = vmatprep.subr.mxu0 0.0
        %399 = vmatpush1.msra.mxu0 0.0
        %400 = vmatprep.subr.mxu0 0.0
        %401 = vmatpush1.msra.mxu0 0.0
        %402 = vmatprep.subr.mxu0 0.0
        %403 = vmatpush1.msra.mxu0 0.0
        %404 = vmatprep.subr.mxu0 0.0
        %405 = vmatpush1.msra.mxu0 0.0
        %406 = vmatprep.subr.mxu0 0.0
        %v407 = vand.u32 %v288, 4294901760
        %v408 = vsub.f32 %v288, %v407
        %v409 = vand.u32 %v408, 4294901760
        %v410 = vsub.f32 %v408, %v409
        %v411 = vand.u32 %v410, 4294901760
        %412 = vmatpush1.msra.mxu0 %v411
        %413 = vmatprep.subr.mxu0 0.0
        %414 = vmatpush2.msra.mxu0 0.0
        %415 = vmatprep.subr.mxu0 0.0
        %416 = vmatpush2.msra.mxu0 0.0
        %417 = vmatprep.subr.mxu0 0.0
        %418 = vmatpush2.msra.mxu0 0.0
        %419 = vmatprep.subr.mxu0 0.0
        %420 = vmatpush2.msra.mxu0 0.0
        %421 = vmatprep.subr.mxu0 0.0
        %422 = vmatpush2.msra.mxu0 0.0
        %423 = vmatprep.subr.mxu0 0.0
        %424 = vmatpush2.msra.mxu0 0.0
        %425 = vmatprep.subr.mxu0 0.0
        %426 = vmatpush2.msra.mxu0 0.0
        %427 = vmatprep.subr.mxu0 0.0
        %428 = vmatpush2.msra.mxu0 0.0
        %429 = vmatprep.subr.mxu0 0.0
        %430 = vmatpush2.msra.mxu0 0.0
        %431 = vmatprep.subr.mxu0 0.0
        %432 = vmatpush2.msra.mxu0 0.0
        %433 = vmatprep.subr.mxu0 0.0
        %434 = vmatpush2.msra.mxu0 0.0
        %435 = vmatprep.subr.mxu0 0.0
        %436 = vmatpush2.msra.mxu0 0.0
        %437 = vmatprep.subr.mxu0 0.0
        %438 = vmatpush2.msra.mxu0 0.0
        %439 = vmatprep.subr.mxu0 0.0
        %440 = vmatpush2.msra.mxu0 0.0
        %441 = vmatprep.subr.mxu0 0.0
        %442 = vmatpush2.msra.mxu0 0.0
        %443 = vmatprep.subr.mxu0 0.0
        %444 = vmatpush2.msra.mxu0 0.0
        %445 = vmatprep.mubr.f32.mxu0 0.0
        %v446 = vand.u32 %v281, 4294901760
        %447 = vmatmul.mubr.f32.gmra.mxu0 %v446
        %v448 = vpop.f32.mrf.mxu0
        %v449 = vadd.f32 %v363, %v448
        %v450 = vpop.f32.mrf.mxu0
        %451 = vmatprep.mubr.f32.mxu0 0.0
        %v452 = vand.u32 %v284, 4294901760
        %453 = vmatmul.mubr.f32.gmra.mxu0 %v452
        %v454 = vpop.f32.mrf.mxu0
        %v455 = vadd.f32 %v373, %v454
        %v456 = vpop.f32.mrf.mxu0
        %457 = vdwg.mxu0
        %458 = vmatprep.subr.mxu0 0.0
        %459 = vmatpush1.msra.mxu0 0.0
        %460 = vmatprep.subr.mxu0 0.0
        %461 = vmatpush1.msra.mxu0 0.0
        %462 = vmatprep.subr.mxu0 0.0
        %463 = vmatpush1.msra.mxu0 0.0
        %464 = vmatprep.subr.mxu0 0.0
        %465 = vmatpush1.msra.mxu0 0.0
        %466 = vmatprep.subr.mxu0 0.0
        %467 = vmatpush1.msra.mxu0 0.0
        %468 = vmatprep.subr.mxu0 0.0
        %469 = vmatpush1.msra.mxu0 0.0
        %470 = vmatprep.subr.mxu0 0.0
        %471 = vmatpush1.msra.mxu0 0.0
        %472 = vmatprep.subr.mxu0 0.0
        %473 = vmatpush1.msra.mxu0 0.0
        %474 = vmatprep.subr.mxu0 0.0
        %475 = vmatpush1.msra.mxu0 0.0
        %476 = vmatprep.subr.mxu0 0.0
        %477 = vmatpush1.msra.mxu0 0.0
        %478 = vmatprep.subr.mxu0 0.0
        %479 = vmatpush1.msra.mxu0 0.0
        %480 = vmatprep.subr.mxu0 0.0
        %481 = vmatpush1.msra.mxu0 0.0
        %482 = vmatprep.subr.mxu0 0.0
        %483 = vmatpush1.msra.mxu0 0.0
        %484 = vmatprep.subr.mxu0 0.0
        %485 = vmatpush1.msra.mxu0 0.0
        %486 = vmatprep.subr.mxu0 0.0
        %487 = vmatpush1.msra.mxu0 0.0
        %488 = vmatprep.subr.mxu0 0.0
        %v489 = vand.u32 %v288, 4294901760
        %v490 = vsub.f32 %v288, %v489
        %491 = vmatpush1.msra.mxu0 %v490
        %492 = vmatprep.subr.mxu0 0.0
        %493 = vmatpush2.msra.mxu0 0.0
        %494 = vmatprep.subr.mxu0 0.0
        %495 = vmatpush2.msra.mxu0 0.0
        %496 = vmatprep.subr.mxu0 0.0
        %497 = vmatpush2.msra.mxu0 0.0
        %498 = vmatprep.subr.mxu0 0.0
        %499 = vmatpush2.msra.mxu0 0.0
        %500 = vmatprep.subr.mxu0 0.0
        %501 = vmatpush2.msra.mxu0 0.0
        %502 = vmatprep.subr.mxu0 0.0
        %503 = vmatpush2.msra.mxu0 0.0
        %504 = vmatprep.subr.mxu0 0.0
        %505 = vmatpush2.msra.mxu0 0.0
        %506 = vmatprep.subr.mxu0 0.0
        %507 = vmatpush2.msra.mxu0 0.0
        %508 = vmatprep.subr.mxu0 0.0
        %509 = vmatpush2.msra.mxu0 0.0
        %510 = vmatprep.subr.mxu0 0.0
        %511 = vmatpush2.msra.mxu0 0.0
        %512 = vmatprep.subr.mxu0 0.0
        %513 = vmatpush2.msra.mxu0 0.0
        %514 = vmatprep.subr.mxu0 0.0
        %515 = vmatpush2.msra.mxu0 0.0
        %516 = vmatprep.subr.mxu0 0.0
        %517 = vmatpush2.msra.mxu0 0.0
        %518 = vmatprep.subr.mxu0 0.0
        %519 = vmatpush2.msra.mxu0 0.0
        %520 = vmatprep.subr.mxu0 0.0
        %521 = vmatpush2.msra.mxu0 0.0
        %522 = vmatprep.subr.mxu0 0.0
        %523 = vmatpush2.msra.mxu0 0.0
        %524 = vmatprep.mubr.f32.mxu0 0.0
        %v525 = vand.u32 %v281, 4294901760
        %v526 = vsub.f32 %v281, %v525
        %527 = vmatmul.mubr.f32.gmra.mxu0 %v526
        %v528 = vpop.f32.mrf.mxu0
        %v529 = vadd.f32 %v449, %v528
        %v530 = vpop.f32.mrf.mxu0
        %531 = vmatprep.mubr.f32.mxu0 0.0
        %v532 = vand.u32 %v284, 4294901760
        %v533 = vsub.f32 %v284, %v532
        %534 = vmatmul.mubr.f32.gmra.mxu0 %v533
        %v535 = vpop.f32.mrf.mxu0
        %v536 = vadd.f32 %v455, %v535
        %v537 = vpop.f32.mrf.mxu0
        %538 = vdwg.mxu0
        %539 = vmatprep.subr.mxu0 0.0
        %540 = vmatpush1.msra.mxu0 0.0
        %541 = vmatprep.subr.mxu0 0.0
        %542 = vmatpush1.msra.mxu0 0.0
        %543 = vmatprep.subr.mxu0 0.0
        %544 = vmatpush1.msra.mxu0 0.0
        %545 = vmatprep.subr.mxu0 0.0
        %546 = vmatpush1.msra.mxu0 0.0
        %547 = vmatprep.subr.mxu0 0.0
        %548 = vmatpush1.msra.mxu0 0.0
        %549 = vmatprep.subr.mxu0 0.0
        %550 = vmatpush1.msra.mxu0 0.0
        %551 = vmatprep.subr.mxu0 0.0
        %552 = vmatpush1.msra.mxu0 0.0
        %553 = vmatprep.subr.mxu0 0.0
        %554 = vmatpush1.msra.mxu0 0.0
        %555 = vmatprep.subr.mxu0 0.0
        %556 = vmatpush1.msra.mxu0 0.0
        %557 = vmatprep.subr.mxu0 0.0
        %558 = vmatpush1.msra.mxu0 0.0
        %559 = vmatprep.subr.mxu0 0.0
        %560 = vmatpush1.msra.mxu0 0.0
        %561 = vmatprep.subr.mxu0 0.0
        %562 = vmatpush1.msra.mxu0 0.0
        %563 = vmatprep.subr.mxu0 0.0
        %564 = vmatpush1.msra.mxu0 0.0
        %565 = vmatprep.subr.mxu0 0.0
        %566 = vmatpush1.msra.mxu0 0.0
        %567 = vmatprep.subr.mxu0 0.0
        %568 = vmatpush1.msra.mxu0 0.0
        %569 = vmatprep.subr.mxu0 0.0
        %v570 = vand.u32 %v288, 4294901760
        %571 = vmatpush1.msra.mxu0 %v570
        %572 = vmatprep.subr.mxu0 0.0
        %573 = vmatpush2.msra.mxu0 0.0
        %574 = vmatprep.subr.mxu0 0.0
        %575 = vmatpush2.msra.mxu0 0.0
        %576 = vmatprep.subr.mxu0 0.0
        %577 = vmatpush2.msra.mxu0 0.0
        %578 = vmatprep.subr.mxu0 0.0
        %579 = vmatpush2.msra.mxu0 0.0
        %580 = vmatprep.subr.mxu0 0.0
        %581 = vmatpush2.msra.mxu0 0.0
        %582 = vmatprep.subr.mxu0 0.0
        %583 = vmatpush2.msra.mxu0 0.0
        %584 = vmatprep.subr.mxu0 0.0
        %585 = vmatpush2.msra.mxu0 0.0
        %586 = vmatprep.subr.mxu0 0.0
        %587 = vmatpush2.msra.mxu0 0.0
        %588 = vmatprep.subr.mxu0 0.0
        %589 = vmatpush2.msra.mxu0 0.0
        %590 = vmatprep.subr.mxu0 0.0
        %591 = vmatpush2.msra.mxu0 0.0
        %592 = vmatprep.subr.mxu0 0.0
        %593 = vmatpush2.msra.mxu0 0.0
        %594 = vmatprep.subr.mxu0 0.0
        %595 = vmatpush2.msra.mxu0 0.0
        %596 = vmatprep.subr.mxu0 0.0
        %597 = vmatpush2.msra.mxu0 0.0
        %598 = vmatprep.subr.mxu0 0.0
        %599 = vmatpush2.msra.mxu0 0.0
        %600 = vmatprep.subr.mxu0 0.0
        %601 = vmatpush2.msra.mxu0 0.0
        %602 = vmatprep.subr.mxu0 0.0
        %603 = vmatpush2.msra.mxu0 0.0
        %604 = vmatprep.mubr.f32.mxu0 0.0
        %v605 = vand.u32 %v281, 4294901760
        %v606 = vsub.f32 %v281, %v605
        %v607 = vand.u32 %v606, 4294901760
        %608 = vmatmul.mubr.f32.gmra.mxu0 %v607
        %v609 = vpop.f32.mrf.mxu0
        %v610 = vadd.f32 %v529, %v609
        %v611 = vpop.f32.mrf.mxu0
        %612 = vmatprep.mubr.f32.mxu0 0.0
        %v613 = vand.u32 %v284, 4294901760
        %v614 = vsub.f32 %v284, %v613
        %v615 = vand.u32 %v614, 4294901760
        %616 = vmatmul.mubr.f32.gmra.mxu0 %v615
        %v617 = vpop.f32.mrf.mxu0
        %v618 = vadd.f32 %v536, %v617
        %v619 = vpop.f32.mrf.mxu0
        %620 = vdwg.mxu0
        %621 = vmatprep.subr.mxu0 0.0
        %622 = vmatpush1.msra.mxu0 0.0
        %623 = vmatprep.subr.mxu0 0.0
        %624 = vmatpush1.msra.mxu0 0.0
        %625 = vmatprep.subr.mxu0 0.0
        %626 = vmatpush1.msra.mxu0 0.0
        %627 = vmatprep.subr.mxu0 0.0
        %628 = vmatpush1.msra.mxu0 0.0
        %629 = vmatprep.subr.mxu0 0.0
        %630 = vmatpush1.msra.mxu0 0.0
        %631 = vmatprep.subr.mxu0 0.0
        %632 = vmatpush1.msra.mxu0 0.0
        %633 = vmatprep.subr.mxu0 0.0
        %634 = vmatpush1.msra.mxu0 0.0
        %635 = vmatprep.subr.mxu0 0.0
        %636 = vmatpush1.msra.mxu0 0.0
        %637 = vmatprep.subr.mxu0 0.0
        %638 = vmatpush1.msra.mxu0 0.0
        %639 = vmatprep.subr.mxu0 0.0
        %640 = vmatpush1.msra.mxu0 0.0
        %641 = vmatprep.subr.mxu0 0.0
        %642 = vmatpush1.msra.mxu0 0.0
        %643 = vmatprep.subr.mxu0 0.0
        %644 = vmatpush1.msra.mxu0 0.0
        %645 = vmatprep.subr.mxu0 0.0
        %646 = vmatpush1.msra.mxu0 0.0
        %647 = vmatprep.subr.mxu0 0.0
        %648 = vmatpush1.msra.mxu0 0.0
        %649 = vmatprep.subr.mxu0 0.0
        %650 = vmatpush1.msra.mxu0 0.0
        %651 = vmatprep.subr.mxu0 0.0
        %v652 = vand.u32 %v288, 4294901760
        %v653 = vsub.f32 %v288, %v652
        %v654 = vand.u32 %v653, 4294901760
        %655 = vmatpush1.msra.mxu0 %v654
        %656 = vmatprep.subr.mxu0 0.0
        %657 = vmatpush2.msra.mxu0 0.0
        %658 = vmatprep.subr.mxu0 0.0
        %659 = vmatpush2.msra.mxu0 0.0
        %660 = vmatprep.subr.mxu0 0.0
        %661 = vmatpush2.msra.mxu0 0.0
        %662 = vmatprep.subr.mxu0 0.0
        %663 = vmatpush2.msra.mxu0 0.0
        %664 = vmatprep.subr.mxu0 0.0
        %665 = vmatpush2.msra.mxu0 0.0
        %666 = vmatprep.subr.mxu0 0.0
        %667 = vmatpush2.msra.mxu0 0.0
        %668 = vmatprep.subr.mxu0 0.0
        %669 = vmatpush2.msra.mxu0 0.0
        %670 = vmatprep.subr.mxu0 0.0
        %671 = vmatpush2.msra.mxu0 0.0
        %672 = vmatprep.subr.mxu0 0.0
        %673 = vmatpush2.msra.mxu0 0.0
        %674 = vmatprep.subr.mxu0 0.0
        %675 = vmatpush2.msra.mxu0 0.0
        %676 = vmatprep.subr.mxu0 0.0
        %677 = vmatpush2.msra.mxu0 0.0
        %678 = vmatprep.subr.mxu0 0.0
        %679 = vmatpush2.msra.mxu0 0.0
        %680 = vmatprep.subr.mxu0 0.0
        %681 = vmatpush2.msra.mxu0 0.0
        %682 = vmatprep.subr.mxu0 0.0
        %683 = vmatpush2.msra.mxu0 0.0
        %684 = vmatprep.subr.mxu0 0.0
        %685 = vmatpush2.msra.mxu0 0.0
        %686 = vmatprep.subr.mxu0 0.0
        %687 = vmatpush2.msra.mxu0 0.0
        %688 = vmatprep.mubr.f32.mxu0 0.0
        %v689 = vand.u32 %v281, 4294901760
        %690 = vmatmul.mubr.f32.gmra.mxu0 %v689
        %v691 = vpop.f32.mrf.mxu0
        %v692 = vadd.f32 %v610, %v691
        %v693 = vpop.f32.mrf.mxu0
        %694 = vmatprep.mubr.f32.mxu0 0.0
        %v695 = vand.u32 %v284, 4294901760
        %696 = vmatmul.mubr.f32.gmra.mxu0 %v695
        %v697 = vpop.f32.mrf.mxu0
        %v698 = vadd.f32 %v618, %v697
        %v699 = vpop.f32.mrf.mxu0
        %700 = vdwg.mxu0
        %701 = vmatprep.subr.mxu0 0.0
        %702 = vmatpush1.msra.mxu0 0.0
        %703 = vmatprep.subr.mxu0 0.0
        %704 = vmatpush1.msra.mxu0 0.0
        %705 = vmatprep.subr.mxu0 0.0
        %706 = vmatpush1.msra.mxu0 0.0
        %707 = vmatprep.subr.mxu0 0.0
        %708 = vmatpush1.msra.mxu0 0.0
        %709 = vmatprep.subr.mxu0 0.0
        %710 = vmatpush1.msra.mxu0 0.0
        %711 = vmatprep.subr.mxu0 0.0
        %712 = vmatpush1.msra.mxu0 0.0
        %713 = vmatprep.subr.mxu0 0.0
        %714 = vmatpush1.msra.mxu0 0.0
        %715 = vmatprep.subr.mxu0 0.0
        %716 = vmatpush1.msra.mxu0 0.0
        %717 = vmatprep.subr.mxu0 0.0
        %718 = vmatpush1.msra.mxu0 0.0
        %719 = vmatprep.subr.mxu0 0.0
        %720 = vmatpush1.msra.mxu0 0.0
        %721 = vmatprep.subr.mxu0 0.0
        %722 = vmatpush1.msra.mxu0 0.0
        %723 = vmatprep.subr.mxu0 0.0
        %724 = vmatpush1.msra.mxu0 0.0
        %725 = vmatprep.subr.mxu0 0.0
        %726 = vmatpush1.msra.mxu0 0.0
        %727 = vmatprep.subr.mxu0 0.0
        %728 = vmatpush1.msra.mxu0 0.0
        %729 = vmatprep.subr.mxu0 0.0
        %730 = vmatpush1.msra.mxu0 0.0
        %731 = vmatprep.subr.mxu0 0.0
        %v732 = vand.u32 %v288, 4294901760
        %733 = vmatpush1.msra.mxu0 %v732
        %734 = vmatprep.subr.mxu0 0.0
        %735 = vmatpush2.msra.mxu0 0.0
        %736 = vmatprep.subr.mxu0 0.0
        %737 = vmatpush2.msra.mxu0 0.0
        %738 = vmatprep.subr.mxu0 0.0
        %739 = vmatpush2.msra.mxu0 0.0
        %740 = vmatprep.subr.mxu0 0.0
        %741 = vmatpush2.msra.mxu0 0.0
        %742 = vmatprep.subr.mxu0 0.0
        %743 = vmatpush2.msra.mxu0 0.0
        %744 = vmatprep.subr.mxu0 0.0
        %745 = vmatpush2.msra.mxu0 0.0
        %746 = vmatprep.subr.mxu0 0.0
        %747 = vmatpush2.msra.mxu0 0.0
        %748 = vmatprep.subr.mxu0 0.0
        %749 = vmatpush2.msra.mxu0 0.0
        %750 = vmatprep.subr.mxu0 0.0
        %751 = vmatpush2.msra.mxu0 0.0
        %752 = vmatprep.subr.mxu0 0.0
        %753 = vmatpush2.msra.mxu0 0.0
        %754 = vmatprep.subr.mxu0 0.0
        %755 = vmatpush2.msra.mxu0 0.0
        %756 = vmatprep.subr.mxu0 0.0
        %757 = vmatpush2.msra.mxu0 0.0
        %758 = vmatprep.subr.mxu0 0.0
        %759 = vmatpush2.msra.mxu0 0.0
        %760 = vmatprep.subr.mxu0 0.0
        %761 = vmatpush2.msra.mxu0 0.0
        %762 = vmatprep.subr.mxu0 0.0
        %763 = vmatpush2.msra.mxu0 0.0
        %764 = vmatprep.subr.mxu0 0.0
        %765 = vmatpush2.msra.mxu0 0.0
        %766 = vmatprep.mubr.f32.mxu0 0.0
        %v767 = vand.u32 %v281, 4294901760
        %768 = vmatmul.mubr.f32.gmra.mxu0 %v767
        %v769 = vpop.f32.mrf.mxu0
        %v770 = vadd.f32 %v692, %v769
        %v771 = vpop.f32.mrf.mxu0
        %772 = vmatprep.mubr.f32.mxu0 0.0
        %v773 = vand.u32 %v284, 4294901760
        %774 = vmatmul.mubr.f32.gmra.mxu0 %v773
        %v775 = vpop.f32.mrf.mxu0
        %v776 = vadd.f32 %v698, %v775
        %v777 = vpop.f32.mrf.mxu0
        %778 = vdwg.mxu0
        %v779 = vld [vmem:[%s4] sm:$0xff]
        %781 = vset.pattern.permute.xlu0 0
        %782 = vperm.xlu0 %781, %v779
        %v783 = vpop.permute.xlu0 %782
        %v785 = vadd.f32 %v770, %v783
        %786 = vset.pattern.permute.xlu0 1
        %787 = vperm.xlu0 %786, %v779
        %v788 = vpop.permute.xlu0 %787
        %790 = vmatprep.subr.mxu0 0.0
        %v791 = vand.u32 %v276, 4294901760
        %792 = vmatpush1.msra.mxu0 %v791
        %793 = vmatprep.subr.mxu0 0.0
        %v794 = vand.u32 %v275, 4294901760
        %795 = vmatpush1.msra.mxu0 %v794
        %796 = vmatprep.subr.mxu0 0.0
        %v797 = vand.u32 %v274, 4294901760
        %798 = vmatpush1.msra.mxu0 %v797
        %799 = vmatprep.subr.mxu0 0.0
        %v800 = vand.u32 %v273, 4294901760
        %801 = vmatpush1.msra.mxu0 %v800
        %802 = vmatprep.subr.mxu0 0.0
        %v803 = vand.u32 %v272, 4294901760
        %804 = vmatpush1.msra.mxu0 %v803
        %805 = vmatprep.subr.mxu0 0.0
        %v806 = vand.u32 %v271, 4294901760
        %807 = vmatpush1.msra.mxu0 %v806
        %808 = vmatprep.subr.mxu0 0.0
        %v809 = vand.u32 %v270, 4294901760
        %810 = vmatpush1.msra.mxu0 %v809
        %811 = vmatprep.subr.mxu0 0.0
        %v812 = vand.u32 %v269, 4294901760
        %813 = vmatpush1.msra.mxu0 %v812
        %814 = vmatprep.subr.mxu0 0.0
        %v815 = vand.u32 %v268, 4294901760
        %816 = vmatpush1.msra.mxu0 %v815
        %817 = vmatprep.subr.mxu0 0.0
        %v818 = vand.u32 %v267, 4294901760
        %819 = vmatpush1.msra.mxu0 %v818
        %820 = vmatprep.subr.mxu0 0.0
        %v821 = vand.u32 %v266, 4294901760
        %822 = vmatpush1.msra.mxu0 %v821
        %823 = vmatprep.subr.mxu0 0.0
        %v824 = vand.u32 %v265, 4294901760
        %825 = vmatpush1.msra.mxu0 %v824
        %826 = vmatprep.subr.mxu0 0.0
        %v827 = vand.u32 %v264, 4294901760
        %828 = vmatpush1.msra.mxu0 %v827
        %829 = vmatprep.subr.mxu0 0.0
        %v830 = vand.u32 %v263, 4294901760
        %831 = vmatpush1.msra.mxu0 %v830
        %832 = vmatprep.subr.mxu0 0.0
        %v833 = vand.u32 %v262, 4294901760
        %834 = vmatpush1.msra.mxu0 %v833
        %835 = vmatprep.subr.mxu0 0.0
        %v836 = vand.u32 %v261, 4294901760
        %837 = vmatpush1.msra.mxu0 %v836
        %838 = vmatprep.subr.mxu0 0.0
        %839 = vmatpush2.msra.mxu0 0.0
        %840 = vmatprep.subr.mxu0 0.0
        %841 = vmatpush2.msra.mxu0 0.0
        %842 = vmatprep.subr.mxu0 0.0
        %843 = vmatpush2.msra.mxu0 0.0
        %844 = vmatprep.subr.mxu0 0.0
        %845 = vmatpush2.msra.mxu0 0.0
        %846 = vmatprep.subr.mxu0 0.0
        %847 = vmatpush2.msra.mxu0 0.0
        %848 = vmatprep.subr.mxu0 0.0
        %849 = vmatpush2.msra.mxu0 0.0
        %850 = vmatprep.subr.mxu0 0.0
        %851 = vmatpush2.msra.mxu0 0.0
        %852 = vmatprep.subr.mxu0 0.0
        %853 = vmatpush2.msra.mxu0 0.0
        %854 = vmatprep.subr.mxu0 0.0
        %855 = vmatpush2.msra.mxu0 0.0
        %856 = vmatprep.subr.mxu0 0.0
        %857 = vmatpush2.msra.mxu0 0.0
        %858 = vmatprep.subr.mxu0 0.0
        %859 = vmatpush2.msra.mxu0 0.0
        %860 = vmatprep.subr.mxu0 0.0
        %861 = vmatpush2.msra.mxu0 0.0
        %862 = vmatprep.subr.mxu0 0.0
        %863 = vmatpush2.msra.mxu0 0.0
        %864 = vmatprep.subr.mxu0 0.0
        %865 = vmatpush2.msra.mxu0 0.0
        %866 = vmatprep.subr.mxu0 0.0
        %867 = vmatpush2.msra.mxu0 0.0
        %868 = vmatprep.subr.mxu0 0.0
        %869 = vmatpush2.msra.mxu0 0.0
        %870 = vmatprep.mubr.f32.mxu0 0.0
        %v871 = vand.u32 %v785, 4294901760
        %v872 = vsub.f32 %v785, %v871
        %v873 = vand.u32 %v872, 4294901760
        %v874 = vsub.f32 %v872, %v873
        %v875 = vand.u32 %v874, 4294901760
        %876 = vmatmul.mubr.f32.gmra.mxu0 %v875
        %v877 = vpop.f32.mrf.mxu0
        %v878 = vadd.f32 %v788, %v877
        %v879 = vpop.f32.mrf.mxu0
        %880 = vdwg.mxu0
        %881 = vmatprep.subr.mxu0 0.0
        %v882 = vand.u32 %v276, 4294901760
        %v883 = vsub.f32 %v276, %v882
        %v884 = vand.u32 %v883, 4294901760
        %v885 = vsub.f32 %v883, %v884
        %v886 = vand.u32 %v885, 4294901760
        %887 = vmatpush1.msra.mxu0 %v886
        %888 = vmatprep.subr.mxu0 0.0
        %v889 = vand.u32 %v275, 4294901760
        %v890 = vsub.f32 %v275, %v889
        %v891 = vand.u32 %v890, 4294901760
        %v892 = vsub.f32 %v890, %v891
        %v893 = vand.u32 %v892, 4294901760
        %894 = vmatpush1.msra.mxu0 %v893
        %895 = vmatprep.subr.mxu0 0.0
        %v896 = vand.u32 %v274, 4294901760
        %v897 = vsub.f32 %v274, %v896
        %v898 = vand.u32 %v897, 4294901760
        %v899 = vsub.f32 %v897, %v898
        %v900 = vand.u32 %v899, 4294901760
        %901 = vmatpush1.msra.mxu0 %v900
        %902 = vmatprep.subr.mxu0 0.0
        %v903 = vand.u32 %v273, 4294901760
        %v904 = vsub.f32 %v273, %v903
        %v905 = vand.u32 %v904, 4294901760
        %v906 = vsub.f32 %v904, %v905
        %v907 = vand.u32 %v906, 4294901760
        %908 = vmatpush1.msra.mxu0 %v907
        %909 = vmatprep.subr.mxu0 0.0
        %v910 = vand.u32 %v272, 4294901760
        %v911 = vsub.f32 %v272, %v910
        %v912 = vand.u32 %v911, 4294901760
        %v913 = vsub.f32 %v911, %v912
        %v914 = vand.u32 %v913, 4294901760
        %915 = vmatpush1.msra.mxu0 %v914
        %916 = vmatprep.subr.mxu0 0.0
        %v917 = vand.u32 %v271, 4294901760
        %v918 = vsub.f32 %v271, %v917
        %v919 = vand.u32 %v918, 4294901760
        %v920 = vsub.f32 %v918, %v919
        %v921 = vand.u32 %v920, 4294901760
        %922 = vmatpush1.msra.mxu0 %v921
        %923 = vmatprep.subr.mxu0 0.0
        %v924 = vand.u32 %v270, 4294901760
        %v925 = vsub.f32 %v270, %v924
        %v926 = vand.u32 %v925, 4294901760
        %v927 = vsub.f32 %v925, %v926
        %v928 = vand.u32 %v927, 4294901760
        %929 = vmatpush1.msra.mxu0 %v928
        %930 = vmatprep.subr.mxu0 0.0
        %v931 = vand.u32 %v269, 4294901760
        %v932 = vsub.f32 %v269, %v931
        %v933 = vand.u32 %v932, 4294901760
        %v934 = vsub.f32 %v932, %v933
        %v935 = vand.u32 %v934, 4294901760
        %936 = vmatpush1.msra.mxu0 %v935
        %937 = vmatprep.subr.mxu0 0.0
        %v938 = vand.u32 %v268, 4294901760
        %v939 = vsub.f32 %v268, %v938
        %v940 = vand.u32 %v939, 4294901760
        %v941 = vsub.f32 %v939, %v940
        %v942 = vand.u32 %v941, 4294901760
        %943 = vmatpush1.msra.mxu0 %v942
        %944 = vmatprep.subr.mxu0 0.0
        %v945 = vand.u32 %v267, 4294901760
        %v946 = vsub.f32 %v267, %v945
        %v947 = vand.u32 %v946, 4294901760
        %v948 = vsub.f32 %v946, %v947
        %v949 = vand.u32 %v948, 4294901760
        %950 = vmatpush1.msra.mxu0 %v949
        %951 = vmatprep.subr.mxu0 0.0
        %v952 = vand.u32 %v266, 4294901760
        %v953 = vsub.f32 %v266, %v952
        %v954 = vand.u32 %v953, 4294901760
        %v955 = vsub.f32 %v953, %v954
        %v956 = vand.u32 %v955, 4294901760
        %957 = vmatpush1.msra.mxu0 %v956
        %958 = vmatprep.subr.mxu0 0.0
        %v959 = vand.u32 %v265, 4294901760
        %v960 = vsub.f32 %v265, %v959
        %v961 = vand.u32 %v960, 4294901760
        %v962 = vsub.f32 %v960, %v961
        %v963 = vand.u32 %v962, 4294901760
        %964 = vmatpush1.msra.mxu0 %v963
        %965 = vmatprep.subr.mxu0 0.0
        %v966 = vand.u32 %v264, 4294901760
        %v967 = vsub.f32 %v264, %v966
        %v968 = vand.u32 %v967, 4294901760
        %v969 = vsub.f32 %v967, %v968
        %v970 = vand.u32 %v969, 4294901760
        %971 = vmatpush1.msra.mxu0 %v970
        %972 = vmatprep.subr.mxu0 0.0
        %v973 = vand.u32 %v263, 4294901760
        %v974 = vsub.f32 %v263, %v973
        %v975 = vand.u32 %v974, 4294901760
        %v976 = vsub.f32 %v974, %v975
        %v977 = vand.u32 %v976, 4294901760
        %978 = vmatpush1.msra.mxu0 %v977
        %979 = vmatprep.subr.mxu0 0.0
        %v980 = vand.u32 %v262, 4294901760
        %v981 = vsub.f32 %v262, %v980
        %v982 = vand.u32 %v981, 4294901760
        %v983 = vsub.f32 %v981, %v982
        %v984 = vand.u32 %v983, 4294901760
        %985 = vmatpush1.msra.mxu0 %v984
        %986 = vmatprep.subr.mxu0 0.0
        %v987 = vand.u32 %v261, 4294901760
        %v988 = vsub.f32 %v261, %v987
        %v989 = vand.u32 %v988, 4294901760
        %v990 = vsub.f32 %v988, %v989
        %v991 = vand.u32 %v990, 4294901760
        %992 = vmatpush1.msra.mxu0 %v991
        %993 = vmatprep.subr.mxu0 0.0
        %994 = vmatpush2.msra.mxu0 0.0
        %995 = vmatprep.subr.mxu0 0.0
        %996 = vmatpush2.msra.mxu0 0.0
        %997 = vmatprep.subr.mxu0 0.0
        %998 = vmatpush2.msra.mxu0 0.0
        %999 = vmatprep.subr.mxu0 0.0
        %1000 = vmatpush2.msra.mxu0 0.0
        %1001 = vmatprep.subr.mxu0 0.0
        %1002 = vmatpush2.msra.mxu0 0.0
        %1003 = vmatprep.subr.mxu0 0.0
        %1004 = vmatpush2.msra.mxu0 0.0
        %1005 = vmatprep.subr.mxu0 0.0
        %1006 = vmatpush2.msra.mxu0 0.0
        %1007 = vmatprep.subr.mxu0 0.0
        %1008 = vmatpush2.msra.mxu0 0.0
        %1009 = vmatprep.subr.mxu0 0.0
        %1010 = vmatpush2.msra.mxu0 0.0
        %1011 = vmatprep.subr.mxu0 0.0
        %1012 = vmatpush2.msra.mxu0 0.0
        %1013 = vmatprep.subr.mxu0 0.0
        %1014 = vmatpush2.msra.mxu0 0.0
        %1015 = vmatprep.subr.mxu0 0.0
        %1016 = vmatpush2.msra.mxu0 0.0
        %1017 = vmatprep.subr.mxu0 0.0
        %1018 = vmatpush2.msra.mxu0 0.0
        %1019 = vmatprep.subr.mxu0 0.0
        %1020 = vmatpush2.msra.mxu0 0.0
        %1021 = vmatprep.subr.mxu0 0.0
        %1022 = vmatpush2.msra.mxu0 0.0
        %1023 = vmatprep.subr.mxu0 0.0
        %1024 = vmatpush2.msra.mxu0 0.0
        %1025 = vmatprep.mubr.f32.mxu0 0.0
        %v1026 = vand.u32 %v785, 4294901760
        %1027 = vmatmul.mubr.f32.gmra.mxu0 %v1026
        %v1028 = vpop.f32.mrf.mxu0
        %v1029 = vadd.f32 %v878, %v1028
        %v1030 = vpop.f32.mrf.mxu0
        %1031 = vdwg.mxu0
        %1032 = vmatprep.subr.mxu0 0.0
        %v1033 = vand.u32 %v276, 4294901760
        %v1034 = vsub.f32 %v276, %v1033
        %1035 = vmatpush1.msra.mxu0 %v1034
        %1036 = vmatprep.subr.mxu0 0.0
        %v1037 = vand.u32 %v275, 4294901760
        %v1038 = vsub.f32 %v275, %v1037
        %1039 = vmatpush1.msra.mxu0 %v1038
        %1040 = vmatprep.subr.mxu0 0.0
        %v1041 = vand.u32 %v274, 4294901760
        %v1042 = vsub.f32 %v274, %v1041
        %1043 = vmatpush1.msra.mxu0 %v1042
        %1044 = vmatprep.subr.mxu0 0.0
        %v1045 = vand.u32 %v273, 4294901760
        %v1046 = vsub.f32 %v273, %v1045
        %1047 = vmatpush1.msra.mxu0 %v1046
        %1048 = vmatprep.subr.mxu0 0.0
        %v1049 = vand.u32 %v272, 4294901760
        %v1050 = vsub.f32 %v272, %v1049
        %1051 = vmatpush1.msra.mxu0 %v1050
        %1052 = vmatprep.subr.mxu0 0.0
        %v1053 = vand.u32 %v271, 4294901760
        %v1054 = vsub.f32 %v271, %v1053
        %1055 = vmatpush1.msra.mxu0 %v1054
        %1056 = vmatprep.subr.mxu0 0.0
        %v1057 = vand.u32 %v270, 4294901760
        %v1058 = vsub.f32 %v270, %v1057
        %1059 = vmatpush1.msra.mxu0 %v1058
        %1060 = vmatprep.subr.mxu0 0.0
        %v1061 = vand.u32 %v269, 4294901760
        %v1062 = vsub.f32 %v269, %v1061
        %1063 = vmatpush1.msra.mxu0 %v1062
        %1064 = vmatprep.subr.mxu0 0.0
        %v1065 = vand.u32 %v268, 4294901760
        %v1066 = vsub.f32 %v268, %v1065
        %1067 = vmatpush1.msra.mxu0 %v1066
        %1068 = vmatprep.subr.mxu0 0.0
        %v1069 = vand.u32 %v267, 4294901760
        %v1070 = vsub.f32 %v267, %v1069
        %1071 = vmatpush1.msra.mxu0 %v1070
        %1072 = vmatprep.subr.mxu0 0.0
        %v1073 = vand.u32 %v266, 4294901760
        %v1074 = vsub.f32 %v266, %v1073
        %1075 = vmatpush1.msra.mxu0 %v1074
        %1076 = vmatprep.subr.mxu0 0.0
        %v1077 = vand.u32 %v265, 4294901760
        %v1078 = vsub.f32 %v265, %v1077
        %1079 = vmatpush1.msra.mxu0 %v1078
        %1080 = vmatprep.subr.mxu0 0.0
        %v1081 = vand.u32 %v264, 4294901760
        %v1082 = vsub.f32 %v264, %v1081
        %1083 = vmatpush1.msra.mxu0 %v1082
        %1084 = vmatprep.subr.mxu0 0.0
        %v1085 = vand.u32 %v263, 4294901760
        %v1086 = vsub.f32 %v263, %v1085
        %1087 = vmatpush1.msra.mxu0 %v1086
        %1088 = vmatprep.subr.mxu0 0.0
        %v1089 = vand.u32 %v262, 4294901760
        %v1090 = vsub.f32 %v262, %v1089
        %1091 = vmatpush1.msra.mxu0 %v1090
        %1092 = vmatprep.subr.mxu0 0.0
        %v1093 = vand.u32 %v261, 4294901760
        %v1094 = vsub.f32 %v261, %v1093
        %1095 = vmatpush1.msra.mxu0 %v1094
        %1096 = vmatprep.subr.mxu0 0.0
        %1097 = vmatpush2.msra.mxu0 0.0
        %1098 = vmatprep.subr.mxu0 0.0
        %1099 = vmatpush2.msra.mxu0 0.0
        %1100 = vmatprep.subr.mxu0 0.0
        %1101 = vmatpush2.msra.mxu0 0.0
        %1102 = vmatprep.subr.mxu0 0.0
        %1103 = vmatpush2.msra.mxu0 0.0
        %1104 = vmatprep.subr.mxu0 0.0
        %1105 = vmatpush2.msra.mxu0 0.0
        %1106 = vmatprep.subr.mxu0 0.0
        %1107 = vmatpush2.msra.mxu0 0.0
        %1108 = vmatprep.subr.mxu0 0.0
        %1109 = vmatpush2.msra.mxu0 0.0
        %1110 = vmatprep.subr.mxu0 0.0
        %1111 = vmatpush2.msra.mxu0 0.0
        %1112 = vmatprep.subr.mxu0 0.0
        %1113 = vmatpush2.msra.mxu0 0.0
        %1114 = vmatprep.subr.mxu0 0.0
        %1115 = vmatpush2.msra.mxu0 0.0
        %1116 = vmatprep.subr.mxu0 0.0
        %1117 = vmatpush2.msra.mxu0 0.0
        %1118 = vmatprep.subr.mxu0 0.0
        %1119 = vmatpush2.msra.mxu0 0.0
        %1120 = vmatprep.subr.mxu0 0.0
        %1121 = vmatpush2.msra.mxu0 0.0
        %1122 = vmatprep.subr.mxu0 0.0
        %1123 = vmatpush2.msra.mxu0 0.0
        %1124 = vmatprep.subr.mxu0 0.0
        %1125 = vmatpush2.msra.mxu0 0.0
        %1126 = vmatprep.subr.mxu0 0.0
        %1127 = vmatpush2.msra.mxu0 0.0
        %1128 = vmatprep.mubr.f32.mxu0 0.0
        %v1129 = vand.u32 %v785, 4294901760
        %v1130 = vsub.f32 %v785, %v1129
        %1131 = vmatmul.mubr.f32.gmra.mxu0 %v1130
        %v1132 = vpop.f32.mrf.mxu0
        %v1133 = vadd.f32 %v1029, %v1132
        %v1134 = vpop.f32.mrf.mxu0
        %1135 = vdwg.mxu0
        %1136 = vmatprep.subr.mxu0 0.0
        %v1137 = vand.u32 %v276, 4294901760
        %1138 = vmatpush1.msra.mxu0 %v1137
        %1139 = vmatprep.subr.mxu0 0.0
        %v1140 = vand.u32 %v275, 4294901760
        %1141 = vmatpush1.msra.mxu0 %v1140
        %1142 = vmatprep.subr.mxu0 0.0
        %v1143 = vand.u32 %v274, 4294901760
        %1144 = vmatpush1.msra.mxu0 %v1143
        %1145 = vmatprep.subr.mxu0 0.0
        %v1146 = vand.u32 %v273, 4294901760
        %1147 = vmatpush1.msra.mxu0 %v1146
        %1148 = vmatprep.subr.mxu0 0.0
        %v1149 = vand.u32 %v272, 4294901760
        %1150 = vmatpush1.msra.mxu0 %v1149
        %1151 = vmatprep.subr.mxu0 0.0
        %v1152 = vand.u32 %v271, 4294901760
        %1153 = vmatpush1.msra.mxu0 %v1152
        %1154 = vmatprep.subr.mxu0 0.0
        %v1155 = vand.u32 %v270, 4294901760
        %1156 = vmatpush1.msra.mxu0 %v1155
        %1157 = vmatprep.subr.mxu0 0.0
        %v1158 = vand.u32 %v269, 4294901760
        %1159 = vmatpush1.msra.mxu0 %v1158
        %1160 = vmatprep.subr.mxu0 0.0
        %v1161 = vand.u32 %v268, 4294901760
        %1162 = vmatpush1.msra.mxu0 %v1161
        %1163 = vmatprep.subr.mxu0 0.0
        %v1164 = vand.u32 %v267, 4294901760
        %1165 = vmatpush1.msra.mxu0 %v1164
        %1166 = vmatprep.subr.mxu0 0.0
        %v1167 = vand.u32 %v266, 4294901760
        %1168 = vmatpush1.msra.mxu0 %v1167
        %1169 = vmatprep.subr.mxu0 0.0
        %v1170 = vand.u32 %v265, 4294901760
        %1171 = vmatpush1.msra.mxu0 %v1170
        %1172 = vmatprep.subr.mxu0 0.0
        %v1173 = vand.u32 %v264, 4294901760
        %1174 = vmatpush1.msra.mxu0 %v1173
        %1175 = vmatprep.subr.mxu0 0.0
        %v1176 = vand.u32 %v263, 4294901760
        %1177 = vmatpush1.msra.mxu0 %v1176
        %1178 = vmatprep.subr.mxu0 0.0
        %v1179 = vand.u32 %v262, 4294901760
        %1180 = vmatpush1.msra.mxu0 %v1179
        %1181 = vmatprep.subr.mxu0 0.0
        %v1182 = vand.u32 %v261, 4294901760
        %1183 = vmatpush1.msra.mxu0 %v1182
        %1184 = vmatprep.subr.mxu0 0.0
        %1185 = vmatpush2.msra.mxu0 0.0
        %1186 = vmatprep.subr.mxu0 0.0
        %1187 = vmatpush2.msra.mxu0 0.0
        %1188 = vmatprep.subr.mxu0 0.0
        %1189 = vmatpush2.msra.mxu0 0.0
        %1190 = vmatprep.subr.mxu0 0.0
        %1191 = vmatpush2.msra.mxu0 0.0
        %1192 = vmatprep.subr.mxu0 0.0
        %1193 = vmatpush2.msra.mxu0 0.0
        %1194 = vmatprep.subr.mxu0 0.0
        %1195 = vmatpush2.msra.mxu0 0.0
        %1196 = vmatprep.subr.mxu0 0.0
        %1197 = vmatpush2.msra.mxu0 0.0
        %1198 = vmatprep.subr.mxu0 0.0
        %1199 = vmatpush2.msra.mxu0 0.0
        %1200 = vmatprep.subr.mxu0 0.0
        %1201 = vmatpush2.msra.mxu0 0.0
        %1202 = vmatprep.subr.mxu0 0.0
        %1203 = vmatpush2.msra.mxu0 0.0
        %1204 = vmatprep.subr.mxu0 0.0
        %1205 = vmatpush2.msra.mxu0 0.0
        %1206 = vmatprep.subr.mxu0 0.0
        %1207 = vmatpush2.msra.mxu0 0.0
        %1208 = vmatprep.subr.mxu0 0.0
        %1209 = vmatpush2.msra.mxu0 0.0
        %1210 = vmatprep.subr.mxu0 0.0
        %1211 = vmatpush2.msra.mxu0 0.0
        %1212 = vmatprep.subr.mxu0 0.0
        %1213 = vmatpush2.msra.mxu0 0.0
        %1214 = vmatprep.subr.mxu0 0.0
        %1215 = vmatpush2.msra.mxu0 0.0
        %1216 = vmatprep.mubr.f32.mxu0 0.0
        %v1217 = vand.u32 %v785, 4294901760
        %v1218 = vsub.f32 %v785, %v1217
        %v1219 = vand.u32 %v1218, 4294901760
        %1220 = vmatmul.mubr.f32.gmra.mxu0 %v1219
        %v1221 = vpop.f32.mrf.mxu0
        %v1222 = vadd.f32 %v1133, %v1221
        %v1223 = vpop.f32.mrf.mxu0
        %1224 = vdwg.mxu0
        %1225 = vmatprep.subr.mxu0 0.0
        %v1226 = vand.u32 %v276, 4294901760
        %v1227 = vsub.f32 %v276, %v1226
        %v1228 = vand.u32 %v1227, 4294901760
        %1229 = vmatpush1.msra.mxu0 %v1228
        %1230 = vmatprep.subr.mxu0 0.0
        %v1231 = vand.u32 %v275, 4294901760
        %v1232 = vsub.f32 %v275, %v1231
        %v1233 = vand.u32 %v1232, 4294901760
        %1234 = vmatpush1.msra.mxu0 %v1233
        %1235 = vmatprep.subr.mxu0 0.0
        %v1236 = vand.u32 %v274, 4294901760
        %v1237 = vsub.f32 %v274, %v1236
        %v1238 = vand.u32 %v1237, 4294901760
        %1239 = vmatpush1.msra.mxu0 %v1238
        %1240 = vmatprep.subr.mxu0 0.0
        %v1241 = vand.u32 %v273, 4294901760
        %v1242 = vsub.f32 %v273, %v1241
        %v1243 = vand.u32 %v1242, 4294901760
        %1244 = vmatpush1.msra.mxu0 %v1243
        %1245 = vmatprep.subr.mxu0 0.0
        %v1246 = vand.u32 %v272, 4294901760
        %v1247 = vsub.f32 %v272, %v1246
        %v1248 = vand.u32 %v1247, 4294901760
        %1249 = vmatpush1.msra.mxu0 %v1248
        %1250 = vmatprep.subr.mxu0 0.0
        %v1251 = vand.u32 %v271, 4294901760
        %v1252 = vsub.f32 %v271, %v1251
        %v1253 = vand.u32 %v1252, 4294901760
        %1254 = vmatpush1.msra.mxu0 %v1253
        %1255 = vmatprep.subr.mxu0 0.0
        %v1256 = vand.u32 %v270, 4294901760
        %v1257 = vsub.f32 %v270, %v1256
        %v1258 = vand.u32 %v1257, 4294901760
        %1259 = vmatpush1.msra.mxu0 %v1258
        %1260 = vmatprep.subr.mxu0 0.0
        %v1261 = vand.u32 %v269, 4294901760
        %v1262 = vsub.f32 %v269, %v1261
        %v1263 = vand.u32 %v1262, 4294901760
        %1264 = vmatpush1.msra.mxu0 %v1263
        %1265 = vmatprep.subr.mxu0 0.0
        %v1266 = vand.u32 %v268, 4294901760
        %v1267 = vsub.f32 %v268, %v1266
        %v1268 = vand.u32 %v1267, 4294901760
        %1269 = vmatpush1.msra.mxu0 %v1268
        %1270 = vmatprep.subr.mxu0 0.0
        %v1271 = vand.u32 %v267, 4294901760
        %v1272 = vsub.f32 %v267, %v1271
        %v1273 = vand.u32 %v1272, 4294901760
        %1274 = vmatpush1.msra.mxu0 %v1273
        %1275 = vmatprep.subr.mxu0 0.0
        %v1276 = vand.u32 %v266, 4294901760
        %v1277 = vsub.f32 %v266, %v1276
        %v1278 = vand.u32 %v1277, 4294901760
        %1279 = vmatpush1.msra.mxu0 %v1278
        %1280 = vmatprep.subr.mxu0 0.0
        %v1281 = vand.u32 %v265, 4294901760
        %v1282 = vsub.f32 %v265, %v1281
        %v1283 = vand.u32 %v1282, 4294901760
        %1284 = vmatpush1.msra.mxu0 %v1283
        %1285 = vmatprep.subr.mxu0 0.0
        %v1286 = vand.u32 %v264, 4294901760
        %v1287 = vsub.f32 %v264, %v1286
        %v1288 = vand.u32 %v1287, 4294901760
        %1289 = vmatpush1.msra.mxu0 %v1288
        %1290 = vmatprep.subr.mxu0 0.0
        %v1291 = vand.u32 %v263, 4294901760
        %v1292 = vsub.f32 %v263, %v1291
        %v1293 = vand.u32 %v1292, 4294901760
        %1294 = vmatpush1.msra.mxu0 %v1293
        %1295 = vmatprep.subr.mxu0 0.0
        %v1296 = vand.u32 %v262, 4294901760
        %v1297 = vsub.f32 %v262, %v1296
        %v1298 = vand.u32 %v1297, 4294901760
        %1299 = vmatpush1.msra.mxu0 %v1298
        %1300 = vmatprep.subr.mxu0 0.0
        %v1301 = vand.u32 %v261, 4294901760
        %v1302 = vsub.f32 %v261, %v1301
        %v1303 = vand.u32 %v1302, 4294901760
        %1304 = vmatpush1.msra.mxu0 %v1303
        %1305 = vmatprep.subr.mxu0 0.0
        %1306 = vmatpush2.msra.mxu0 0.0
        %1307 = vmatprep.subr.mxu0 0.0
        %1308 = vmatpush2.msra.mxu0 0.0
        %1309 = vmatprep.subr.mxu0 0.0
        %1310 = vmatpush2.msra.mxu0 0.0
        %1311 = vmatprep.subr.mxu0 0.0
        %1312 = vmatpush2.msra.mxu0 0.0
        %1313 = vmatprep.subr.mxu0 0.0
        %1314 = vmatpush2.msra.mxu0 0.0
        %1315 = vmatprep.subr.mxu0 0.0
        %1316 = vmatpush2.msra.mxu0 0.0
        %1317 = vmatprep.subr.mxu0 0.0
        %1318 = vmatpush2.msra.mxu0 0.0
        %1319 = vmatprep.subr.mxu0 0.0
        %1320 = vmatpush2.msra.mxu0 0.0
        %1321 = vmatprep.subr.mxu0 0.0
        %1322 = vmatpush2.msra.mxu0 0.0
        %1323 = vmatprep.subr.mxu0 0.0
        %1324 = vmatpush2.msra.mxu0 0.0
        %1325 = vmatprep.subr.mxu0 0.0
        %1326 = vmatpush2.msra.mxu0 0.0
        %1327 = vmatprep.subr.mxu0 0.0
        %1328 = vmatpush2.msra.mxu0 0.0
        %1329 = vmatprep.subr.mxu0 0.0
        %1330 = vmatpush2.msra.mxu0 0.0
        %1331 = vmatprep.subr.mxu0 0.0
        %1332 = vmatpush2.msra.mxu0 0.0
        %1333 = vmatprep.subr.mxu0 0.0
        %1334 = vmatpush2.msra.mxu0 0.0
        %1335 = vmatprep.subr.mxu0 0.0
        %1336 = vmatpush2.msra.mxu0 0.0
        %1337 = vmatprep.mubr.f32.mxu0 0.0
        %v1338 = vand.u32 %v785, 4294901760
        %1339 = vmatmul.mubr.f32.gmra.mxu0 %v1338
        %v1340 = vpop.f32.mrf.mxu0
        %v1341 = vadd.f32 %v1222, %v1340
        %v1342 = vpop.f32.mrf.mxu0
        %1343 = vdwg.mxu0
        %1344 = vmatprep.subr.mxu0 0.0
        %v1345 = vand.u32 %v276, 4294901760
        %1346 = vmatpush1.msra.mxu0 %v1345
        %1347 = vmatprep.subr.mxu0 0.0
        %v1348 = vand.u32 %v275, 4294901760
        %1349 = vmatpush1.msra.mxu0 %v1348
        %1350 = vmatprep.subr.mxu0 0.0
        %v1351 = vand.u32 %v274, 4294901760
        %1352 = vmatpush1.msra.mxu0 %v1351
        %1353 = vmatprep.subr.mxu0 0.0
        %v1354 = vand.u32 %v273, 4294901760
        %1355 = vmatpush1.msra.mxu0 %v1354
        %1356 = vmatprep.subr.mxu0 0.0
        %v1357 = vand.u32 %v272, 4294901760
        %1358 = vmatpush1.msra.mxu0 %v1357
        %1359 = vmatprep.subr.mxu0 0.0
        %v1360 = vand.u32 %v271, 4294901760
        %1361 = vmatpush1.msra.mxu0 %v1360
        %1362 = vmatprep.subr.mxu0 0.0
        %v1363 = vand.u32 %v270, 4294901760
        %1364 = vmatpush1.msra.mxu0 %v1363
        %1365 = vmatprep.subr.mxu0 0.0
        %v1366 = vand.u32 %v269, 4294901760
        %1367 = vmatpush1.msra.mxu0 %v1366
        %1368 = vmatprep.subr.mxu0 0.0
        %v1369 = vand.u32 %v268, 4294901760
        %1370 = vmatpush1.msra.mxu0 %v1369
        %1371 = vmatprep.subr.mxu0 0.0
        %v1372 = vand.u32 %v267, 4294901760
        %1373 = vmatpush1.msra.mxu0 %v1372
        %1374 = vmatprep.subr.mxu0 0.0
        %v1375 = vand.u32 %v266, 4294901760
        %1376 = vmatpush1.msra.mxu0 %v1375
        %1377 = vmatprep.subr.mxu0 0.0
        %v1378 = vand.u32 %v265, 4294901760
        %1379 = vmatpush1.msra.mxu0 %v1378
        %1380 = vmatprep.subr.mxu0 0.0
        %v1381 = vand.u32 %v264, 4294901760
        %1382 = vmatpush1.msra.mxu0 %v1381
        %1383 = vmatprep.subr.mxu0 0.0
        %v1384 = vand.u32 %v263, 4294901760
        %1385 = vmatpush1.msra.mxu0 %v1384
        %1386 = vmatprep.subr.mxu0 0.0
        %v1387 = vand.u32 %v262, 4294901760
        %1388 = vmatpush1.msra.mxu0 %v1387
        %1389 = vmatprep.subr.mxu0 0.0
        %v1390 = vand.u32 %v261, 4294901760
        %1391 = vmatpush1.msra.mxu0 %v1390
        %1392 = vmatprep.subr.mxu0 0.0
        %1393 = vmatpush2.msra.mxu0 0.0
        %1394 = vmatprep.subr.mxu0 0.0
        %1395 = vmatpush2.msra.mxu0 0.0
        %1396 = vmatprep.subr.mxu0 0.0
        %1397 = vmatpush2.msra.mxu0 0.0
        %1398 = vmatprep.subr.mxu0 0.0
        %1399 = vmatpush2.msra.mxu0 0.0
        %1400 = vmatprep.subr.mxu0 0.0
        %1401 = vmatpush2.msra.mxu0 0.0
        %1402 = vmatprep.subr.mxu0 0.0
        %1403 = vmatpush2.msra.mxu0 0.0
        %1404 = vmatprep.subr.mxu0 0.0
        %1405 = vmatpush2.msra.mxu0 0.0
        %1406 = vmatprep.subr.mxu0 0.0
        %1407 = vmatpush2.msra.mxu0 0.0
        %1408 = vmatprep.subr.mxu0 0.0
        %1409 = vmatpush2.msra.mxu0 0.0
        %1410 = vmatprep.subr.mxu0 0.0
        %1411 = vmatpush2.msra.mxu0 0.0
        %1412 = vmatprep.subr.mxu0 0.0
        %1413 = vmatpush2.msra.mxu0 0.0
        %1414 = vmatprep.subr.mxu0 0.0
        %1415 = vmatpush2.msra.mxu0 0.0
        %1416 = vmatprep.subr.mxu0 0.0
        %1417 = vmatpush2.msra.mxu0 0.0
        %1418 = vmatprep.subr.mxu0 0.0
        %1419 = vmatpush2.msra.mxu0 0.0
        %1420 = vmatprep.subr.mxu0 0.0
        %1421 = vmatpush2.msra.mxu0 0.0
        %1422 = vmatprep.subr.mxu0 0.0
        %1423 = vmatpush2.msra.mxu0 0.0
        %1424 = vmatprep.mubr.f32.mxu0 0.0
        %v1425 = vand.u32 %v785, 4294901760
        %1426 = vmatmul.mubr.f32.gmra.mxu0 %v1425
        %v1427 = vpop.f32.mrf.mxu0
        %v1428 = vadd.f32 %v1341, %v1427
        %v1429 = vpop.f32.mrf.mxu0
        %1430 = vdwg.mxu0
        %vm1431 = vcmp.gt.f32.partialorder %v1428, 0.0
        %1432 = vset.pattern.permute.xlu0 2
        %1433 = vperm.xlu0 %1432, %v779
        %v1434 = vpop.permute.xlu0 %1433
        %v1436 = vmul.f32 %v1434, %v1428
        %v1437 = vsel %vm1431, %v1428, %v1436
        %v1438 = vlaneseq
        %v1439 = vand.u32 %v1438, 127
        %1440 = vrot.lane.b32.xlu0 %v1437, 16
        %v1441 = vpop.permute.xlu0 %1440
        %vm1442 = vcmp.ge.s32.totalorder %v1439, 16
        %v1443 = vsel %vm1442, %v1441, %v1437
        %1444 = vrot.lane.b32.xlu0 %v1437, 32
        %v1445 = vpop.permute.xlu0 %1444
        %vm1446 = vcmp.ge.s32.totalorder %v1439, 32
        %v1447 = vsel %vm1446, %v1445, %v1443
        %v1448 = vld [vmem:[%s3] sm:$0xff]
        %vm1449 = vcmask 195584
        %v1451 = vsel %vm1449, %v1448, 0
        %1453 = vmatprep.subr.mxu0 0.0
        %1454 = vmatpush1.msra.mxu0 0.0
        %1455 = vmatprep.subr.mxu0 0.0
        %1456 = vmatpush1.msra.mxu0 0.0
        %1457 = vmatprep.subr.mxu0 0.0
        %1458 = vmatpush1.msra.mxu0 0.0
        %1459 = vmatprep.subr.mxu0 0.0
        %1460 = vmatpush1.msra.mxu0 0.0
        %1461 = vmatprep.subr.mxu0 0.0
        %1462 = vmatpush1.msra.mxu0 0.0
        %1463 = vmatprep.subr.mxu0 0.0
        %1464 = vmatpush1.msra.mxu0 0.0
        %1465 = vmatprep.subr.mxu0 0.0
        %1466 = vmatpush1.msra.mxu0 0.0
        %1467 = vmatprep.subr.mxu0 0.0
        %1468 = vmatpush1.msra.mxu0 0.0
        %1469 = vmatprep.subr.mxu0 0.0
        %1470 = vmatpush1.msra.mxu0 0.0
        %1471 = vmatprep.subr.mxu0 0.0
        %1472 = vmatpush1.msra.mxu0 0.0
        %1473 = vmatprep.subr.mxu0 0.0
        %1474 = vmatpush1.msra.mxu0 0.0
        %1475 = vmatprep.subr.mxu0 0.0
        %1476 = vmatpush1.msra.mxu0 0.0
        %1477 = vmatprep.subr.mxu0 0.0
        %1478 = vmatpush1.msra.mxu0 0.0
        %1479 = vmatprep.subr.mxu0 0.0
        %v1480 = vand.u32 %v1447, 4294901760
        %1481 = vmatpush1.msra.mxu0 %v1480
        %1482 = vmatprep.subr.mxu0 0.0
        %v1483 = vand.u32 %v1443, 4294901760
        %1484 = vmatpush1.msra.mxu0 %v1483
        %1485 = vmatprep.subr.mxu0 0.0
        %v1486 = vand.u32 %v1437, 4294901760
        %1487 = vmatpush1.msra.mxu0 %v1486
        %1488 = vmatprep.subr.mxu0 0.0
        %1489 = vmatpush2.msra.mxu0 0.0
        %1490 = vmatprep.subr.mxu0 0.0
        %1491 = vmatpush2.msra.mxu0 0.0
        %1492 = vmatprep.subr.mxu0 0.0
        %1493 = vmatpush2.msra.mxu0 0.0
        %1494 = vmatprep.subr.mxu0 0.0
        %1495 = vmatpush2.msra.mxu0 0.0
        %1496 = vmatprep.subr.mxu0 0.0
        %1497 = vmatpush2.msra.mxu0 0.0
        %1498 = vmatprep.subr.mxu0 0.0
        %1499 = vmatpush2.msra.mxu0 0.0
        %1500 = vmatprep.subr.mxu0 0.0
        %1501 = vmatpush2.msra.mxu0 0.0
        %1502 = vmatprep.subr.mxu0 0.0
        %1503 = vmatpush2.msra.mxu0 0.0
        %1504 = vmatprep.subr.mxu0 0.0
        %1505 = vmatpush2.msra.mxu0 0.0
        %1506 = vmatprep.subr.mxu0 0.0
        %1507 = vmatpush2.msra.mxu0 0.0
        %1508 = vmatprep.subr.mxu0 0.0
        %1509 = vmatpush2.msra.mxu0 0.0
        %1510 = vmatprep.subr.mxu0 0.0
        %1511 = vmatpush2.msra.mxu0 0.0
        %1512 = vmatprep.subr.mxu0 0.0
        %1513 = vmatpush2.msra.mxu0 0.0
        %1514 = vmatprep.subr.mxu0 0.0
        %1515 = vmatpush2.msra.mxu0 0.0
        %1516 = vmatprep.subr.mxu0 0.0
        %1517 = vmatpush2.msra.mxu0 0.0
        %1518 = vmatprep.subr.mxu0 0.0
        %1519 = vmatpush2.msra.mxu0 0.0
        %1520 = vmatprep.mubr.f32.mxu0 0.0
        %v1521 = vand.u32 %v1451, 4294901760
        %v1522 = vsub.f32 %v1451, %v1521
        %v1523 = vand.u32 %v1522, 4294901760
        %v1524 = vsub.f32 %v1522, %v1523
        %v1525 = vand.u32 %v1524, 4294901760
        %1526 = vmatmul.mubr.f32.gmra.mxu0 %v1525
        %v1527 = vpop.f32.mrf.mxu0
        %v1528 = vadd.f32 %v776, %v1527
        %v1529 = vpop.f32.mrf.mxu0
        %1530 = vdwg.mxu0
        %1531 = vmatprep.subr.mxu0 0.0
        %1532 = vmatpush1.msra.mxu0 0.0
        %1533 = vmatprep.subr.mxu0 0.0
        %1534 = vmatpush1.msra.mxu0 0.0
        %1535 = vmatprep.subr.mxu0 0.0
        %1536 = vmatpush1.msra.mxu0 0.0
        %1537 = vmatprep.subr.mxu0 0.0
        %1538 = vmatpush1.msra.mxu0 0.0
        %1539 = vmatprep.subr.mxu0 0.0
        %1540 = vmatpush1.msra.mxu0 0.0
        %1541 = vmatprep.subr.mxu0 0.0
        %1542 = vmatpush1.msra.mxu0 0.0
        %1543 = vmatprep.subr.mxu0 0.0
        %1544 = vmatpush1.msra.mxu0 0.0
        %1545 = vmatprep.subr.mxu0 0.0
        %1546 = vmatpush1.msra.mxu0 0.0
        %1547 = vmatprep.subr.mxu0 0.0
        %1548 = vmatpush1.msra.mxu0 0.0
        %1549 = vmatprep.subr.mxu0 0.0
        %1550 = vmatpush1.msra.mxu0 0.0
        %1551 = vmatprep.subr.mxu0 0.0
        %1552 = vmatpush1.msra.mxu0 0.0
        %1553 = vmatprep.subr.mxu0 0.0
        %1554 = vmatpush1.msra.mxu0 0.0
        %1555 = vmatprep.subr.mxu0 0.0
        %1556 = vmatpush1.msra.mxu0 0.0
        %1557 = vmatprep.subr.mxu0 0.0
        %v1558 = vand.u32 %v1447, 4294901760
        %v1559 = vsub.f32 %v1447, %v1558
        %v1560 = vand.u32 %v1559, 4294901760
        %v1561 = vsub.f32 %v1559, %v1560
        %v1562 = vand.u32 %v1561, 4294901760
        %1563 = vmatpush1.msra.mxu0 %v1562
        %1564 = vmatprep.subr.mxu0 0.0
        %v1565 = vand.u32 %v1443, 4294901760
        %v1566 = vsub.f32 %v1443, %v1565
        %v1567 = vand.u32 %v1566, 4294901760
        %v1568 = vsub.f32 %v1566, %v1567
        %v1569 = vand.u32 %v1568, 4294901760
        %1570 = vmatpush1.msra.mxu0 %v1569
        %1571 = vmatprep.subr.mxu0 0.0
        %v1572 = vand.u32 %v1437, 4294901760
        %v1573 = vsub.f32 %v1437, %v1572
        %v1574 = vand.u32 %v1573, 4294901760
        %v1575 = vsub.f32 %v1573, %v1574
        %v1576 = vand.u32 %v1575, 4294901760
        %1577 = vmatpush1.msra.mxu0 %v1576
        %1578 = vmatprep.subr.mxu0 0.0
        %1579 = vmatpush2.msra.mxu0 0.0
        %1580 = vmatprep.subr.mxu0 0.0
        %1581 = vmatpush2.msra.mxu0 0.0
        %1582 = vmatprep.subr.mxu0 0.0
        %1583 = vmatpush2.msra.mxu0 0.0
        %1584 = vmatprep.subr.mxu0 0.0
        %1585 = vmatpush2.msra.mxu0 0.0
        %1586 = vmatprep.subr.mxu0 0.0
        %1587 = vmatpush2.msra.mxu0 0.0
        %1588 = vmatprep.subr.mxu0 0.0
        %1589 = vmatpush2.msra.mxu0 0.0
        %1590 = vmatprep.subr.mxu0 0.0
        %1591 = vmatpush2.msra.mxu0 0.0
        %1592 = vmatprep.subr.mxu0 0.0
        %1593 = vmatpush2.msra.mxu0 0.0
        %1594 = vmatprep.subr.mxu0 0.0
        %1595 = vmatpush2.msra.mxu0 0.0
        %1596 = vmatprep.subr.mxu0 0.0
        %1597 = vmatpush2.msra.mxu0 0.0
        %1598 = vmatprep.subr.mxu0 0.0
        %1599 = vmatpush2.msra.mxu0 0.0
        %1600 = vmatprep.subr.mxu0 0.0
        %1601 = vmatpush2.msra.mxu0 0.0
        %1602 = vmatprep.subr.mxu0 0.0
        %1603 = vmatpush2.msra.mxu0 0.0
        %1604 = vmatprep.subr.mxu0 0.0
        %1605 = vmatpush2.msra.mxu0 0.0
        %1606 = vmatprep.subr.mxu0 0.0
        %1607 = vmatpush2.msra.mxu0 0.0
        %1608 = vmatprep.subr.mxu0 0.0
        %1609 = vmatpush2.msra.mxu0 0.0
        %1610 = vmatprep.mubr.f32.mxu0 0.0
        %v1611 = vand.u32 %v1451, 4294901760
        %1612 = vmatmul.mubr.f32.gmra.mxu0 %v1611
        %v1613 = vpop.f32.mrf.mxu0
        %v1614 = vadd.f32 %v1528, %v1613
        %v1615 = vpop.f32.mrf.mxu0
        %1616 = vdwg.mxu0
        %1617 = vmatprep.subr.mxu0 0.0
        %1618 = vmatpush1.msra.mxu0 0.0
        %1619 = vmatprep.subr.mxu0 0.0
        %1620 = vmatpush1.msra.mxu0 0.0
        %1621 = vmatprep.subr.mxu0 0.0
        %1622 = vmatpush1.msra.mxu0 0.0
        %1623 = vmatprep.subr.mxu0 0.0
        %1624 = vmatpush1.msra.mxu0 0.0
        %1625 = vmatprep.subr.mxu0 0.0
        %1626 = vmatpush1.msra.mxu0 0.0
        %1627 = vmatprep.subr.mxu0 0.0
        %1628 = vmatpush1.msra.mxu0 0.0
        %1629 = vmatprep.subr.mxu0 0.0
        %1630 = vmatpush1.msra.mxu0 0.0
        %1631 = vmatprep.subr.mxu0 0.0
        %1632 = vmatpush1.msra.mxu0 0.0
        %1633 = vmatprep.subr.mxu0 0.0
        %1634 = vmatpush1.msra.mxu0 0.0
        %1635 = vmatprep.subr.mxu0 0.0
        %1636 = vmatpush1.msra.mxu0 0.0
        %1637 = vmatprep.subr.mxu0 0.0
        %1638 = vmatpush1.msra.mxu0 0.0
        %1639 = vmatprep.subr.mxu0 0.0
        %1640 = vmatpush1.msra.mxu0 0.0
        %1641 = vmatprep.subr.mxu0 0.0
        %1642 = vmatpush1.msra.mxu0 0.0
        %1643 = vmatprep.subr.mxu0 0.0
        %v1644 = vand.u32 %v1447, 4294901760
        %v1645 = vsub.f32 %v1447, %v1644
        %1646 = vmatpush1.msra.mxu0 %v1645
        %1647 = vmatprep.subr.mxu0 0.0
        %v1648 = vand.u32 %v1443, 4294901760
        %v1649 = vsub.f32 %v1443, %v1648
        %1650 = vmatpush1.msra.mxu0 %v1649
        %1651 = vmatprep.subr.mxu0 0.0
        %v1652 = vand.u32 %v1437, 4294901760
        %v1653 = vsub.f32 %v1437, %v1652
        %1654 = vmatpush1.msra.mxu0 %v1653
        %1655 = vmatprep.subr.mxu0 0.0
        %1656 = vmatpush2.msra.mxu0 0.0
        %1657 = vmatprep.subr.mxu0 0.0
        %1658 = vmatpush2.msra.mxu0 0.0
        %1659 = vmatprep.subr.mxu0 0.0
        %1660 = vmatpush2.msra.mxu0 0.0
        %1661 = vmatprep.subr.mxu0 0.0
        %1662 = vmatpush2.msra.mxu0 0.0
        %1663 = vmatprep.subr.mxu0 0.0
        %1664 = vmatpush2.msra.mxu0 0.0
        %1665 = vmatprep.subr.mxu0 0.0
        %1666 = vmatpush2.msra.mxu0 0.0
        %1667 = vmatprep.subr.mxu0 0.0
        %1668 = vmatpush2.msra.mxu0 0.0
        %1669 = vmatprep.subr.mxu0 0.0
        %1670 = vmatpush2.msra.mxu0 0.0
        %1671 = vmatprep.subr.mxu0 0.0
        %1672 = vmatpush2.msra.mxu0 0.0
        %1673 = vmatprep.subr.mxu0 0.0
        %1674 = vmatpush2.msra.mxu0 0.0
        %1675 = vmatprep.subr.mxu0 0.0
        %1676 = vmatpush2.msra.mxu0 0.0
        %1677 = vmatprep.subr.mxu0 0.0
        %1678 = vmatpush2.msra.mxu0 0.0
        %1679 = vmatprep.subr.mxu0 0.0
        %1680 = vmatpush2.msra.mxu0 0.0
        %1681 = vmatprep.subr.mxu0 0.0
        %1682 = vmatpush2.msra.mxu0 0.0
        %1683 = vmatprep.subr.mxu0 0.0
        %1684 = vmatpush2.msra.mxu0 0.0
        %1685 = vmatprep.subr.mxu0 0.0
        %1686 = vmatpush2.msra.mxu0 0.0
        %1687 = vmatprep.mubr.f32.mxu0 0.0
        %v1688 = vand.u32 %v1451, 4294901760
        %v1689 = vsub.f32 %v1451, %v1688
        %1690 = vmatmul.mubr.f32.gmra.mxu0 %v1689
        %v1691 = vpop.f32.mrf.mxu0
        %v1692 = vadd.f32 %v1614, %v1691
        %v1693 = vpop.f32.mrf.mxu0
        %1694 = vdwg.mxu0
        %1695 = vmatprep.subr.mxu0 0.0
        %1696 = vmatpush1.msra.mxu0 0.0
        %1697 = vmatprep.subr.mxu0 0.0
        %1698 = vmatpush1.msra.mxu0 0.0
        %1699 = vmatprep.subr.mxu0 0.0
        %1700 = vmatpush1.msra.mxu0 0.0
        %1701 = vmatprep.subr.mxu0 0.0
        %1702 = vmatpush1.msra.mxu0 0.0
        %1703 = vmatprep.subr.mxu0 0.0
        %1704 = vmatpush1.msra.mxu0 0.0
        %1705 = vmatprep.subr.mxu0 0.0
        %1706 = vmatpush1.msra.mxu0 0.0
        %1707 = vmatprep.subr.mxu0 0.0
        %1708 = vmatpush1.msra.mxu0 0.0
        %1709 = vmatprep.subr.mxu0 0.0
        %1710 = vmatpush1.msra.mxu0 0.0
        %1711 = vmatprep.subr.mxu0 0.0
        %1712 = vmatpush1.msra.mxu0 0.0
        %1713 = vmatprep.subr.mxu0 0.0
        %1714 = vmatpush1.msra.mxu0 0.0
        %1715 = vmatprep.subr.mxu0 0.0
        %1716 = vmatpush1.msra.mxu0 0.0
        %1717 = vmatprep.subr.mxu0 0.0
        %1718 = vmatpush1.msra.mxu0 0.0
        %1719 = vmatprep.subr.mxu0 0.0
        %1720 = vmatpush1.msra.mxu0 0.0
        %1721 = vmatprep.subr.mxu0 0.0
        %v1722 = vand.u32 %v1447, 4294901760
        %1723 = vmatpush1.msra.mxu0 %v1722
        %1724 = vmatprep.subr.mxu0 0.0
        %v1725 = vand.u32 %v1443, 4294901760
        %1726 = vmatpush1.msra.mxu0 %v1725
        %1727 = vmatprep.subr.mxu0 0.0
        %v1728 = vand.u32 %v1437, 4294901760
        %1729 = vmatpush1.msra.mxu0 %v1728
        %1730 = vmatprep.subr.mxu0 0.0
        %1731 = vmatpush2.msra.mxu0 0.0
        %1732 = vmatprep.subr.mxu0 0.0
        %1733 = vmatpush2.msra.mxu0 0.0
        %1734 = vmatprep.subr.mxu0 0.0
        %1735 = vmatpush2.msra.mxu0 0.0
        %1736 = vmatprep.subr.mxu0 0.0
        %1737 = vmatpush2.msra.mxu0 0.0
        %1738 = vmatprep.subr.mxu0 0.0
        %1739 = vmatpush2.msra.mxu0 0.0
        %1740 = vmatprep.subr.mxu0 0.0
        %1741 = vmatpush2.msra.mxu0 0.0
        %1742 = vmatprep.subr.mxu0 0.0
        %1743 = vmatpush2.msra.mxu0 0.0
        %1744 = vmatprep.subr.mxu0 0.0
        %1745 = vmatpush2.msra.mxu0 0.0
        %1746 = vmatprep.subr.mxu0 0.0
        %1747 = vmatpush2.msra.mxu0 0.0
        %1748 = vmatprep.subr.mxu0 0.0
        %1749 = vmatpush2.msra.mxu0 0.0
        %1750 = vmatprep.subr.mxu0 0.0
        %1751 = vmatpush2.msra.mxu0 0.0
        %1752 = vmatprep.subr.mxu0 0.0
        %1753 = vmatpush2.msra.mxu0 0.0
        %1754 = vmatprep.subr.mxu0 0.0
        %1755 = vmatpush2.msra.mxu0 0.0
        %1756 = vmatprep.subr.mxu0 0.0
        %1757 = vmatpush2.msra.mxu0 0.0
        %1758 = vmatprep.subr.mxu0 0.0
        %1759 = vmatpush2.msra.mxu0 0.0
        %1760 = vmatprep.subr.mxu0 0.0
        %1761 = vmatpush2.msra.mxu0 0.0
        %1762 = vmatprep.mubr.f32.mxu0 0.0
        %v1763 = vand.u32 %v1451, 4294901760
        %v1764 = vsub.f32 %v1451, %v1763
        %v1765 = vand.u32 %v1764, 4294901760
        %1766 = vmatmul.mubr.f32.gmra.mxu0 %v1765
        %v1767 = vpop.f32.mrf.mxu0
        %v1768 = vadd.f32 %v1692, %v1767
        %v1769 = vpop.f32.mrf.mxu0
        %1770 = vdwg.mxu0
        %1771 = vmatprep.subr.mxu0 0.0
        %1772 = vmatpush1.msra.mxu0 0.0
        %1773 = vmatprep.subr.mxu0 0.0
        %1774 = vmatpush1.msra.mxu0 0.0
        %1775 = vmatprep.subr.mxu0 0.0
        %1776 = vmatpush1.msra.mxu0 0.0
        %1777 = vmatprep.subr.mxu0 0.0
        %1778 = vmatpush1.msra.mxu0 0.0
        %1779 = vmatprep.subr.mxu0 0.0
        %1780 = vmatpush1.msra.mxu0 0.0
        %1781 = vmatprep.subr.mxu0 0.0
        %1782 = vmatpush1.msra.mxu0 0.0
        %1783 = vmatprep.subr.mxu0 0.0
        %1784 = vmatpush1.msra.mxu0 0.0
        %1785 = vmatprep.subr.mxu0 0.0
        %1786 = vmatpush1.msra.mxu0 0.0
        %1787 = vmatprep.subr.mxu0 0.0
        %1788 = vmatpush1.msra.mxu0 0.0
        %1789 = vmatprep.subr.mxu0 0.0
        %1790 = vmatpush1.msra.mxu0 0.0
        %1791 = vmatprep.subr.mxu0 0.0
        %1792 = vmatpush1.msra.mxu0 0.0
        %1793 = vmatprep.subr.mxu0 0.0
        %1794 = vmatpush1.msra.mxu0 0.0
        %1795 = vmatprep.subr.mxu0 0.0
        %1796 = vmatpush1.msra.mxu0 0.0
        %1797 = vmatprep.subr.mxu0 0.0
        %v1798 = vand.u32 %v1447, 4294901760
        %v1799 = vsub.f32 %v1447, %v1798
        %v1800 = vand.u32 %v1799, 4294901760
        %1801 = vmatpush1.msra.mxu0 %v1800
        %1802 = vmatprep.subr.mxu0 0.0
        %v1803 = vand.u32 %v1443, 4294901760
        %v1804 = vsub.f32 %v1443, %v1803
        %v1805 = vand.u32 %v1804, 4294901760
        %1806 = vmatpush1.msra.mxu0 %v1805
        %1807 = vmatprep.subr.mxu0 0.0
        %v1808 = vand.u32 %v1437, 4294901760
        %v1809 = vsub.f32 %v1437, %v1808
        %v1810 = vand.u32 %v1809, 4294901760
        %1811 = vmatpush1.msra.mxu0 %v1810
        %1812 = vmatprep.subr.mxu0 0.0
        %1813 = vmatpush2.msra.mxu0 0.0
        %1814 = vmatprep.subr.mxu0 0.0
        %1815 = vmatpush2.msra.mxu0 0.0
        %1816 = vmatprep.subr.mxu0 0.0
        %1817 = vmatpush2.msra.mxu0 0.0
        %1818 = vmatprep.subr.mxu0 0.0
        %1819 = vmatpush2.msra.mxu0 0.0
        %1820 = vmatprep.subr.mxu0 0.0
        %1821 = vmatpush2.msra.mxu0 0.0
        %1822 = vmatprep.subr.mxu0 0.0
        %1823 = vmatpush2.msra.mxu0 0.0
        %1824 = vmatprep.subr.mxu0 0.0
        %1825 = vmatpush2.msra.mxu0 0.0
        %1826 = vmatprep.subr.mxu0 0.0
        %1827 = vmatpush2.msra.mxu0 0.0
        %1828 = vmatprep.subr.mxu0 0.0
        %1829 = vmatpush2.msra.mxu0 0.0
        %1830 = vmatprep.subr.mxu0 0.0
        %1831 = vmatpush2.msra.mxu0 0.0
        %1832 = vmatprep.subr.mxu0 0.0
        %1833 = vmatpush2.msra.mxu0 0.0
        %1834 = vmatprep.subr.mxu0 0.0
        %1835 = vmatpush2.msra.mxu0 0.0
        %1836 = vmatprep.subr.mxu0 0.0
        %1837 = vmatpush2.msra.mxu0 0.0
        %1838 = vmatprep.subr.mxu0 0.0
        %1839 = vmatpush2.msra.mxu0 0.0
        %1840 = vmatprep.subr.mxu0 0.0
        %1841 = vmatpush2.msra.mxu0 0.0
        %1842 = vmatprep.subr.mxu0 0.0
        %1843 = vmatpush2.msra.mxu0 0.0
        %1844 = vmatprep.mubr.f32.mxu0 0.0
        %v1845 = vand.u32 %v1451, 4294901760
        %1846 = vmatmul.mubr.f32.gmra.mxu0 %v1845
        %v1847 = vpop.f32.mrf.mxu0
        %v1848 = vadd.f32 %v1768, %v1847
        %v1849 = vpop.f32.mrf.mxu0
        %1850 = vdwg.mxu0
        %1851 = vmatprep.subr.mxu0 0.0
        %1852 = vmatpush1.msra.mxu0 0.0
        %1853 = vmatprep.subr.mxu0 0.0
        %1854 = vmatpush1.msra.mxu0 0.0
        %1855 = vmatprep.subr.mxu0 0.0
        %1856 = vmatpush1.msra.mxu0 0.0
        %1857 = vmatprep.subr.mxu0 0.0
        %1858 = vmatpush1.msra.mxu0 0.0
        %1859 = vmatprep.subr.mxu0 0.0
        %1860 = vmatpush1.msra.mxu0 0.0
        %1861 = vmatprep.subr.mxu0 0.0
        %1862 = vmatpush1.msra.mxu0 0.0
        %1863 = vmatprep.subr.mxu0 0.0
        %1864 = vmatpush1.msra.mxu0 0.0
        %1865 = vmatprep.subr.mxu0 0.0
        %1866 = vmatpush1.msra.mxu0 0.0
        %1867 = vmatprep.subr.mxu0 0.0
        %1868 = vmatpush1.msra.mxu0 0.0
        %1869 = vmatprep.subr.mxu0 0.0
        %1870 = vmatpush1.msra.mxu0 0.0
        %1871 = vmatprep.subr.mxu0 0.0
        %1872 = vmatpush1.msra.mxu0 0.0
        %1873 = vmatprep.subr.mxu0 0.0
        %1874 = vmatpush1.msra.mxu0 0.0
        %1875 = vmatprep.subr.mxu0 0.0
        %1876 = vmatpush1.msra.mxu0 0.0
        %1877 = vmatprep.subr.mxu0 0.0
        %v1878 = vand.u32 %v1447, 4294901760
        %1879 = vmatpush1.msra.mxu0 %v1878
        %1880 = vmatprep.subr.mxu0 0.0
        %v1881 = vand.u32 %v1443, 4294901760
        %1882 = vmatpush1.msra.mxu0 %v1881
        %1883 = vmatprep.subr.mxu0 0.0
        %v1884 = vand.u32 %v1437, 4294901760
        %1885 = vmatpush1.msra.mxu0 %v1884
        %1886 = vmatprep.subr.mxu0 0.0
        %1887 = vmatpush2.msra.mxu0 0.0
        %1888 = vmatprep.subr.mxu0 0.0
        %1889 = vmatpush2.msra.mxu0 0.0
        %1890 = vmatprep.subr.mxu0 0.0
        %1891 = vmatpush2.msra.mxu0 0.0
        %1892 = vmatprep.subr.mxu0 0.0
        %1893 = vmatpush2.msra.mxu0 0.0
        %1894 = vmatprep.subr.mxu0 0.0
        %1895 = vmatpush2.msra.mxu0 0.0
        %1896 = vmatprep.subr.mxu0 0.0
        %1897 = vmatpush2.msra.mxu0 0.0
        %1898 = vmatprep.subr.mxu0 0.0
        %1899 = vmatpush2.msra.mxu0 0.0
        %1900 = vmatprep.subr.mxu0 0.0
        %1901 = vmatpush2.msra.mxu0 0.0
        %1902 = vmatprep.subr.mxu0 0.0
        %1903 = vmatpush2.msra.mxu0 0.0
        %1904 = vmatprep.subr.mxu0 0.0
        %1905 = vmatpush2.msra.mxu0 0.0
        %1906 = vmatprep.subr.mxu0 0.0
        %1907 = vmatpush2.msra.mxu0 0.0
        %1908 = vmatprep.subr.mxu0 0.0
        %1909 = vmatpush2.msra.mxu0 0.0
        %1910 = vmatprep.subr.mxu0 0.0
        %1911 = vmatpush2.msra.mxu0 0.0
        %1912 = vmatprep.subr.mxu0 0.0
        %1913 = vmatpush2.msra.mxu0 0.0
        %1914 = vmatprep.subr.mxu0 0.0
        %1915 = vmatpush2.msra.mxu0 0.0
        %1916 = vmatprep.subr.mxu0 0.0
        %1917 = vmatpush2.msra.mxu0 0.0
        %1918 = vmatprep.mubr.f32.mxu0 0.0
        %v1919 = vand.u32 %v1451, 4294901760
        %1920 = vmatmul.mubr.f32.gmra.mxu0 %v1919
        %v1921 = vpop.f32.mrf.mxu0
        %v1922 = vadd.f32 %v1848, %v1921
        %v1923 = vpop.f32.mrf.mxu0
        %1924 = vdwg.mxu0
        %1925 = vset.pattern.permute.xlu0 3
        %1926 = vperm.xlu0 %1925, %v779
        %v1927 = vpop.permute.xlu0 %1926
        %v1929 = vadd.f32 %v1922, %v1927
        %vm1930 = vcmp.gt.f32.partialorder %v1929, 0.0
        %1931 = vset.pattern.permute.xlu0 4
        %1932 = vperm.xlu0 %1931, %v779
        %v1933 = vpop.permute.xlu0 %1932
        %v1935 = vmul.f32 %v1933, %v1929
        %v1936 = vsel %vm1930, %v1929, %v1935
        %1937 = vst [vmem:[%s255] sm:$0xff] %v1936
        %s1938 = sand.u32 %s145, 1
        %s1939 = scalar_lea.sflag [#allocation4], %s1938
        %s1940 = sand.u32 %s145, 1
        %s1941 = smul.addr %s1940, 8
        %s1942 = scalar_lea.vmem [#allocation5], %s1941
        // Predicated region
        $region45: #{tpu_custom_call.1} parent=39 // pred_check
          %p1943 = pneg %p155
        $region46: #{tpu_custom_call.1} parent=39 // pred_check_branch
          %1945 = sbr.rel (%p1943) target = $region48
        $region47: #{tpu_custom_call.1} parent=39 // pred_region
          %s1947 = ssub.s32 128, 128
          %1948 = vsyncadd %s1939, %s1947
          %s1949 = smul.addr %s22, 128
          %s1950 = scalar_lea.hbm %s5, %s1949
          %s1952 = sshll.u32 %s1942, 4
          %s1953 = int_to_ptr.vmem [resolvable:$true] %s1952
          %1955 = dma.vmem_to_hbm [thread:$0]  %s1953, 128, %s1950, %s1939
        $region48: #{tpu_custom_call.1} parent=39 // pred_fallthru
          _
      $region40: #{tpu_custom_call.1} parent=5 // pred_fallthru
        _
      %p1956 = scmp.le.s32.totalorder 2, %s17
      // Predicated region
      $region49: #{tpu_custom_call.1} parent=5 // pred_check
        %p1957 = pneg %p1956
      $region50: #{tpu_custom_call.1} parent=5 // pred_check_branch
        %1959 = sbr.rel (%p1957) target = $region52
      $region51: #{tpu_custom_call.1} parent=5 // pred_region
        %s1960 = ssub.s32 %s17, 2
        // Predicated region
        $region53: #{tpu_custom_call.1} parent=51 // pred_check
          %p1961 = pneg %p161
        $region54: #{tpu_custom_call.1} parent=51 // pred_check_branch
          %1963 = sbr.rel (%p1961) target = $region56
        $region55: #{tpu_custom_call.1} parent=51 // pred_region
          %s1964 = sand.u32 %s146, 1
          %s1965 = scalar_lea.sflag [#allocation4], %s1964
          %s1966 = sand.u32 %s146, 1
          %s1967 = smul.addr %s1966, 8
          %s1968 = scalar_lea.vmem [#allocation5], %s1967
          %1969 = dma.done %s1965, 128
        $region56: #{tpu_custom_call.1} parent=51 // pred_fallthru
          _
      $region52: #{tpu_custom_call.1} parent=5 // pred_fallthru
        _
    $region6: #{tpu_custom_call.1} parent=1 // loop_footer
      %s21 = sadd.s32 1, %s17
    $region7: #{tpu_custom_call.1} parent=1 // loop_footer_branch
      %16 = sbr.rel target = $region3
    $region8: #{tpu_custom_call.1} parent=1 // loop_exit
      _
    %1970 = vsyncpa [#allocation3], 1
    %s1971 = scalar_lea.sflag [#allocation3], 1
    %1972 = vsyncpa %s1971, 1
    %1973 = vsyncpa [#allocation4], 1
    %s1974 = scalar_lea.sflag [#allocation4], 1
    %1975 = vsyncpa %s1974, 1

</llo_original>
